<compile_context>
chip_gen: v7x
topology: tpu7x:2x2x1
jax: 0.10.0
libtpu: 0.0.40
codegen_flags: <defaults>
</compile_context>

<pallas_src>
import functools
import math

import jax
import jax.numpy as jnp
from jax.experimental import pallas as pl
from jax.experimental.pallas import tpu as pltpu


# ---------------------------------------------------------------------------
# In-kernel helpers
# ---------------------------------------------------------------------------
def _layernorm(x, gamma, beta, eps=1e-5):
    mu = jnp.mean(x, axis=-1, keepdims=True)
    var = jnp.mean((x - mu) ** 2, axis=-1, keepdims=True)
    return (x - mu) * jax.lax.rsqrt(var + eps) * gamma + beta


# ---------------------------------------------------------------------------
# Fused encoder-layer kernel
# ---------------------------------------------------------------------------
def encoder_layer_kernel(x_ref, pos_ref, mask_ref,
                         wq_ref, bq_ref, wk_ref, bk_ref, wv_ref, bv_ref,
                         wo_ref, bo_ref, ln1g_ref, ln1b_ref,
                         w1_ref, b1_ref, w2_ref, b2_ref, ln2g_ref, ln2b_ref,
                         lnfg_ref, lnfb_ref,
                         out_ref,
                         k_scr, v_scr, ctx_scr,
                         *, nhead, tq, final_ln):
    # Grid = (batch, query-tile).  x_ref / pos_ref are the FULL sequence for this batch element
    # (their block index is constant along the tile axis, so they are DMA'd once per batch elem).
    t = pl.program_id(1)
    S = x_ref.shape[1]
    D = x_ref.shape[2]
    hd = D // nhead
    scale = 1.0 / math.sqrt(hd)

    # ---- K/V projection: once per batch element, hoisted out of the query-tile axis ----
    @pl.when(t == 0)
    def _():
        xkv = x_ref[0]                           # (S, D) bf16
        kin = xkv + pos_ref[0]                   # bf16 elementwise add (keys = x + pos)
        k_scr[...] = (jnp.dot(kin, wk_ref[...], preferred_element_type=jnp.float32)
                      + bk_ref[...]).astype(jnp.bfloat16)
        v_scr[...] = (jnp.dot(xkv, wv_ref[...], preferred_element_type=jnp.float32)
                      + bv_ref[...]).astype(jnp.bfloat16)

    # ---- query tile: residual stream slice + lane-dense Q projection ----
    q_start = pl.multiple_of(t * tq, tq)
    xq = x_ref[0, pl.ds(q_start, tq), :]                         # (TQ, D) bf16 residual
    q_in = xq + pos_ref[0, pl.ds(q_start, tq), :]                # queries = x + pos
    q = (jnp.dot(q_in, wq_ref[...], preferred_element_type=jnp.float32)
         + bq_ref[...]) * scale                                  # (TQ, D) f32
    q = q.astype(jnp.bfloat16)

    # Key-padding mask bias (1.0 = padded key), hoisted out of the head loop.
    mask_bias = mask_ref[0].astype(jnp.float32) * (-1e9)         # (1, S)

    # ---- per-head attention; head contexts written at static lane offsets into ctx_scr ----
    for h in range(nhead):                       # static unroll; nhead is small
        lo, hi = h * hd, (h + 1) * hd
        kh = k_scr[:, lo:hi]                     # (S, hd) bf16
        vh = v_scr[:, lo:hi]                     # (S, hd) bf16
        s = jax.lax.dot_general(                 # (TQ, S) — contract head dim, no transpose
            q[:, lo:hi], kh,
            dimension_numbers=(((1,), (1,)), ((), ())),
            preferred_element_type=jnp.float32)
        s = s + mask_bias
        s = s - jnp.max(s, axis=-1, keepdims=True)
        p = jnp.exp(s)
        p = p * pl.reciprocal(jnp.sum(p, axis=-1, keepdims=True), approx=True)
        ctx_scr[:, lo:hi] = jnp.dot(p.astype(jnp.bfloat16), vh,
                                    preferred_element_type=jnp.float32).astype(jnp.bfloat16)

    # ---- single lane-dense output projection over the concatenated heads ----
    attn = jnp.dot(ctx_scr[...], wo_ref[...],
                   preferred_element_type=jnp.float32) + bo_ref[...]      # (TQ, D) f32

    # ---- residual + LayerNorm 1 (f32) ----
    y = xq.astype(jnp.float32) + attn
    y = _layernorm(y, ln1g_ref[...], ln1b_ref[...])

    # ---- feed-forward: bf16 MXU operands, f32 accumulation, ReLU then immediate bf16 ----
    h1 = jnp.dot(y.astype(jnp.bfloat16), w1_ref[...],
                 preferred_element_type=jnp.float32) + b1_ref[...]
    h1 = jnp.maximum(h1, 0.0).astype(jnp.bfloat16)
    h2 = jnp.dot(h1, w2_ref[...], preferred_element_type=jnp.float32) + b2_ref[...]

    # ---- residual + LayerNorm 2 (f32) ----
    z = _layernorm(y + h2, ln2g_ref[...], ln2b_ref[...])

    # ---- optional stack-level final LayerNorm, folded into the last layer ----
    if final_ln:
        z = _layernorm(z, lnfg_ref[...], lnfb_ref[...])

    out_ref[0] = z.astype(out_ref.dtype)


# ---------------------------------------------------------------------------
# Parameter packing (standard (D,D) layout -> bf16 kernel layout).  Call ONCE,
# outside the forward loop (weights stay packed in HBM across forwards).
# ---------------------------------------------------------------------------
def pack_layer_params(p):
    """Standard layout: wq/wk/wv/wo (D, D) applied as x @ W; w1 (D, F); w2 (F, D);
    biases (1, dim); LN params (1, D).  (PyTorch weights must be transposed first.)"""
    D = p["wq"].shape[0]
    F = p["w1"].shape[1]
    bf16, f32 = jnp.bfloat16, jnp.float32
    return {
        "wq": p["wq"].astype(bf16), "bq": p["bq"].reshape(1, D).astype(f32),
        "wk": p["wk"].astype(bf16), "bk": p["bk"].reshape(1, D).astype(f32),
        "wv": p["wv"].astype(bf16), "bv": p["bv"].reshape(1, D).astype(f32),
        "wo": p["wo"].astype(bf16), "bo": p["bo"].reshape(1, D).astype(f32),
        "ln1_g": p["ln1_g"].reshape(1, D).astype(f32),
        "ln1_b": p["ln1_b"].reshape(1, D).astype(f32),
        "w1": p["w1"].astype(bf16), "b1": p["b1"].reshape(1, F).astype(f32),
        "w2": p["w2"].astype(bf16), "b2": p["b2"].reshape(1, D).astype(f32),
        "ln2_g": p["ln2_g"].reshape(1, D).astype(f32),
        "ln2_b": p["ln2_b"].reshape(1, D).astype(f32),
    }


def pack_all_layers(layer_params):
    return [pack_layer_params(p) for p in layer_params]


# ---------------------------------------------------------------------------
# Wrappers
# ---------------------------------------------------------------------------
def _pick_tq(S, tq):
    if tq is not None and S % tq == 0:
        return tq
    # Prefer an (8,*)-aligned divisor of S no larger than 128 (small FFN temp, several
    # grid steps); otherwise any divisor <= 128; otherwise the full sequence.
    for cand in range(min(S, 128), 7, -1):
        if cand % 8 == 0 and S % cand == 0:
            return cand
    for cand in range(min(S, 128), 0, -1):
        if S % cand == 0:
            return cand
    return S


def run_encoder_layer(x, pos, mask_b1s, packed, nhead, tq, final_norm=None):
    B, S, D = x.shape
    F = packed["w1"].shape[1]
    n_tq = S // tq

    seqmap = lambda b, t: (b, 0, 0)          # full-sequence blocks: fetched once per batch elem

    def full(shape):
        return pl.BlockSpec(shape, lambda b, t: (0,) * len(shape))

    if final_norm is not None:
        lnf_g = final_norm["g"].reshape(1, D).astype(jnp.float32)
        lnf_b = final_norm["b"].reshape(1, D).astype(jnp.float32)
        apply_final = True
    else:
        lnf_g = jnp.ones((1, D), jnp.float32)
        lnf_b = jnp.zeros((1, D), jnp.float32)
        apply_final = False

    in_specs = [
        pl.BlockSpec((1, S, D), seqmap),      # x   (full sequence, bf16)
        pl.BlockSpec((1, S, D), seqmap),      # pos (full sequence, bf16)
        pl.BlockSpec((1, 1, S), seqmap),      # key-padding mask (1.0 = padded key)
        full((D, D)), full((1, D)),           # wq, bq
        full((D, D)), full((1, D)),           # wk, bk
        full((D, D)), full((1, D)),           # wv, bv
        full((D, D)), full((1, D)),           # wo, bo
        full((1, D)), full((1, D)),           # ln1 gamma, beta
        full((D, F)), full((1, F)),           # w1, b1
        full((F, D)), full((1, D)),           # w2, b2
        full((1, D)), full((1, D)),           # ln2 gamma, beta
        full((1, D)), full((1, D)),           # final-norm gamma, beta (unused if apply_final=False)
    ]

    scratch_shapes = [
        pltpu.VMEM((S, D), jnp.bfloat16),     # K (per batch element, persists across tiles)
        pltpu.VMEM((S, D), jnp.bfloat16),     # V
        pltpu.VMEM((tq, D), jnp.bfloat16),    # concatenated head contexts for the query tile
    ]

    return pl.pallas_call(
        functools.partial(encoder_layer_kernel, nhead=nhead, tq=tq, final_ln=apply_final),
        grid=(B, n_tq),
        in_specs=in_specs,
        out_specs=pl.BlockSpec((1, tq, D), lambda b, t: (b, t, 0)),
        out_shape=jax.ShapeDtypeStruct((B, S, D), jnp.bfloat16),
        scratch_shapes=scratch_shapes,
        compiler_params=pltpu.CompilerParams(
            # tile axis is 'arbitrary': K/V scratch carries state across query tiles.
            dimension_semantics=("parallel", "arbitrary")),
    )(x, pos, mask_b1s,
      packed["wq"], packed["bq"], packed["wk"], packed["bk"],
      packed["wv"], packed["bv"], packed["wo"], packed["bo"],
      packed["ln1_g"], packed["ln1_b"],
      packed["w1"], packed["b1"], packed["w2"], packed["b2"],
      packed["ln2_g"], packed["ln2_b"],
      lnf_g, lnf_b)


def transformer_encoder(x, mask, pos, packed_layers, final_norm=None, nhead=4, tq=None):
    """Stack of TransformerEncoderLayer.forward_post (+ optional final LayerNorm, fused into
    the last layer's kernel).  `packed_layers` must be pre-packed via pack_all_layers()."""
    B, S, _ = x.shape
    tq = _pick_tq(S, tq)
    mask_b1s = mask.astype(jnp.float32).reshape(B, 1, S)
    # Residual stream and pos live in bf16 in HBM; all in-kernel norm/softmax math is f32.
    out = x.astype(jnp.bfloat16)
    pos_bf = pos.astype(jnp.bfloat16)
    n = len(packed_layers)
    for i, packed in enumerate(packed_layers):
        fn = final_norm if i == n - 1 else None
        out = run_encoder_layer(out, pos_bf, mask_b1s, packed, nhead, tq, final_norm=fn)
    return out


# ---------------------------------------------------------------------------
# Deterministic parameter init (standard layout; see pack_layer_params)
# ---------------------------------------------------------------------------
def init_layer_params(key, d_model, dim_ff):
    ks = jax.random.split(key, 6)
    sc = 0.02
    return {
        "wq": sc * jax.random.normal(ks[0], (d_model, d_model), jnp.float32),
        "bq": jnp.zeros((1, d_model), jnp.float32),
        "wk": sc * jax.random.normal(ks[1], (d_model, d_model), jnp.float32),
        "bk": jnp.zeros((1, d_model), jnp.float32),
        "wv": sc * jax.random.normal(ks[2], (d_model, d_model), jnp.float32),
        "bv": jnp.zeros((1, d_model), jnp.float32),
        "wo": sc * jax.random.normal(ks[3], (d_model, d_model), jnp.float32),
        "bo": jnp.zeros((1, d_model), jnp.float32),
        "ln1_g": jnp.ones((1, d_model), jnp.float32),
        "ln1_b": jnp.zeros((1, d_model), jnp.float32),
        "w1": sc * jax.random.normal(ks[4], (d_model, dim_ff), jnp.float32),
        "b1": jnp.zeros((1, dim_ff), jnp.float32),
        "w2": sc * jax.random.normal(ks[5], (dim_ff, d_model), jnp.float32),
        "b2": jnp.zeros((1, d_model), jnp.float32),
        "ln2_g": jnp.ones((1, d_model), jnp.float32),
        "ln2_b": jnp.zeros((1, d_model), jnp.float32),
    }


if __name__ == "__main__":
    B, S, D, NHEAD, FF, NUM_LAYERS, TQ = 2, 16, 32, 4, 64, 2, 8

    key = jax.random.PRNGKey(0)
    k_x, k_pos, k_layers = jax.random.split(key, 3)

    x = jax.random.normal(k_x, (B, S, D), jnp.float32)
    pos = jax.random.normal(k_pos, (B, S, D), jnp.float32)

    # key-padding mask: True (1) = padded; pad last 2 tokens of batch element 1
    mask = jnp.zeros((B, S), jnp.bool_).at[1, -2:].set(True)

    layer_keys = jax.random.split(k_layers, NUM_LAYERS)
    layer_params = [init_layer_params(k, D, FF) for k in layer_keys]
    packed_layers = pack_all_layers(layer_params)   # packed ONCE, outside the forward path
    final_norm = {"g": jnp.ones((1, D), jnp.float32), "b": jnp.zeros((1, D), jnp.float32)}

    out = transformer_encoder(x, mask, pos, packed_layers,
                              final_norm=final_norm, nhead=NHEAD, tq=TQ)
    out = jax.block_until_ready(out)
    assert out.shape == (B, S, D)
    assert bool(jnp.all(jnp.isfinite(out.astype(jnp.float32))))
    print("KERNEL_OK")
</pallas_src>

<mosaic_0001>
module attributes {stable_mosaic.version = 11 : i64} {
  func.func @encoder_layer_kernel(%arg0: i32, %arg1: i32, %arg2: memref<1x16x32xbf16, #tpu.memory_space<vmem>>, %arg3: memref<1x16x32xbf16, #tpu.memory_space<vmem>>, %arg4: memref<1x1x16xf32, #tpu.memory_space<vmem>>, %arg5: memref<32x32xbf16, #tpu.memory_space<vmem>>, %arg6: memref<1x32xf32, #tpu.memory_space<vmem>>, %arg7: memref<32x32xbf16, #tpu.memory_space<vmem>>, %arg8: memref<1x32xf32, #tpu.memory_space<vmem>>, %arg9: memref<32x32xbf16, #tpu.memory_space<vmem>>, %arg10: memref<1x32xf32, #tpu.memory_space<vmem>>, %arg11: memref<32x32xbf16, #tpu.memory_space<vmem>>, %arg12: memref<1x32xf32, #tpu.memory_space<vmem>>, %arg13: memref<1x32xf32, #tpu.memory_space<vmem>>, %arg14: memref<1x32xf32, #tpu.memory_space<vmem>>, %arg15: memref<32x64xbf16, #tpu.memory_space<vmem>>, %arg16: memref<1x64xf32, #tpu.memory_space<vmem>>, %arg17: memref<64x32xbf16, #tpu.memory_space<vmem>>, %arg18: memref<1x32xf32, #tpu.memory_space<vmem>>, %arg19: memref<1x32xf32, #tpu.memory_space<vmem>>, %arg20: memref<1x32xf32, #tpu.memory_space<vmem>>, %arg21: memref<1x32xf32, #tpu.memory_space<vmem>>, %arg22: memref<1x32xf32, #tpu.memory_space<vmem>>, %arg23: memref<1x8x32xbf16, #tpu.memory_space<vmem>>, %arg24: memref<16x32xbf16, #tpu.memory_space<vmem>>, %arg25: memref<16x32xbf16, #tpu.memory_space<vmem>>, %arg26: memref<8x32xbf16, #tpu.memory_space<vmem>>) attributes {dimension_semantics = [#tpu.dimension_semantics<parallel>, #tpu.dimension_semantics<arbitrary>], iteration_bounds = array<i64: 2, 2>, scalar_prefetch = 0 : i64, scratch_operands = 3 : i64, tpu.core_type = #tpu.core_type<tc>, window_params = [{transform_indices = @transform_0, window_bounds = array<i64: 1, 16, 32>}, {transform_indices = @transform_1, window_bounds = array<i64: 1, 16, 32>}, {transform_indices = @transform_2, window_bounds = array<i64: 1, 1, 16>}, {pipeline_mode = #tpu.pipeline_mode<synchronous>, transform_indices = @transform_3, window_bounds = array<i64: 32, 32>}, {pipeline_mode = #tpu.pipeline_mode<synchronous>, transform_indices = @transform_4, window_bounds = array<i64: 1, 32>}, {pipeline_mode = #tpu.pipeline_mode<synchronous>, transform_indices = @transform_5, window_bounds = array<i64: 32, 32>}, {pipeline_mode = #tpu.pipeline_mode<synchronous>, transform_indices = @transform_6, window_bounds = array<i64: 1, 32>}, {pipeline_mode = #tpu.pipeline_mode<synchronous>, transform_indices = @transform_7, window_bounds = array<i64: 32, 32>}, {pipeline_mode = #tpu.pipeline_mode<synchronous>, transform_indices = @transform_8, window_bounds = array<i64: 1, 32>}, {pipeline_mode = #tpu.pipeline_mode<synchronous>, transform_indices = @transform_9, window_bounds = array<i64: 32, 32>}, {pipeline_mode = #tpu.pipeline_mode<synchronous>, transform_indices = @transform_10, window_bounds = array<i64: 1, 32>}, {pipeline_mode = #tpu.pipeline_mode<synchronous>, transform_indices = @transform_11, window_bounds = array<i64: 1, 32>}, {pipeline_mode = #tpu.pipeline_mode<synchronous>, transform_indices = @transform_12, window_bounds = array<i64: 1, 32>}, {pipeline_mode = #tpu.pipeline_mode<synchronous>, transform_indices = @transform_13, window_bounds = array<i64: 32, 64>}, {pipeline_mode = #tpu.pipeline_mode<synchronous>, transform_indices = @transform_14, window_bounds = array<i64: 1, 64>}, {pipeline_mode = #tpu.pipeline_mode<synchronous>, transform_indices = @transform_15, window_bounds = array<i64: 64, 32>}, {pipeline_mode = #tpu.pipeline_mode<synchronous>, transform_indices = @transform_16, window_bounds = array<i64: 1, 32>}, {pipeline_mode = #tpu.pipeline_mode<synchronous>, transform_indices = @transform_17, window_bounds = array<i64: 1, 32>}, {pipeline_mode = #tpu.pipeline_mode<synchronous>, transform_indices = @transform_18, window_bounds = array<i64: 1, 32>}, {pipeline_mode = #tpu.pipeline_mode<synchronous>, transform_indices = @transform_19, window_bounds = array<i64: 1, 32>}, {pipeline_mode = #tpu.pipeline_mode<synchronous>, transform_indices = @transform_20, window_bounds = array<i64: 1, 32>}, {transform_indices = @transform_21, window_bounds = array<i64: 1, 8, 32>}]} {
    %c0_i32 = arith.constant 0 : i32
    %0 = arith.cmpi eq, %arg1, %c0_i32 : i32
    %1 = arith.extui %0 : i1 to i32
    %c0_i32_0 = arith.constant 0 : i32
    %2 = arith.cmpi ne, %1, %c0_i32_0 : i32
    scf.if %2 {
      %c0_89 = arith.constant 0 : index
      %c0_90 = arith.constant 0 : index
      %c0_91 = arith.constant 0 : index
      %179 = vector.load %arg2[%c0_89, %c0_90, %c0_91] : memref<1x16x32xbf16, #tpu.memory_space<vmem>>, vector<1x16x32xbf16>
      %180 = vector.shape_cast %179 : vector<1x16x32xbf16> to vector<16x32xbf16>
      %c0_92 = arith.constant 0 : index
      %c0_93 = arith.constant 0 : index
      %c0_94 = arith.constant 0 : index
      %181 = vector.load %arg3[%c0_92, %c0_93, %c0_94] : memref<1x16x32xbf16, #tpu.memory_space<vmem>>, vector<1x16x32xbf16>
      %182 = vector.shape_cast %181 : vector<1x16x32xbf16> to vector<16x32xbf16>
      %183 = arith.addf %180, %182 : vector<16x32xbf16>
      %c0_95 = arith.constant 0 : index
      %c0_96 = arith.constant 0 : index
      %184 = vector.load %arg7[%c0_95, %c0_96] : memref<32x32xbf16, #tpu.memory_space<vmem>>, vector<32x32xbf16>
      %cst_97 = arith.constant dense<0.000000e+00> : vector<16x32xf32>
      %185 = tpu.matmul %183, %184, %cst_97 {dimension_numbers = #tpu.dot_dimension_numbers<[1], [0], [0], [1], [0, 0, 1, 1], [], []>} : vector<16x32xbf16>, vector<32x32xbf16>, vector<16x32xf32> -> vector<16x32xf32>
      %c0_98 = arith.constant 0 : index
      %c0_99 = arith.constant 0 : index
      %186 = vector.load %arg8[%c0_98, %c0_99] : memref<1x32xf32, #tpu.memory_space<vmem>>, vector<1x32xf32>
      %187 = vector.broadcast %186 : vector<1x32xf32> to vector<16x32xf32>
      %188 = arith.addf %185, %187 : vector<16x32xf32>
      %189 = arith.truncf %188 : vector<16x32xf32> to vector<16x32xbf16>
      %c0_100 = arith.constant 0 : index
      %c0_101 = arith.constant 0 : index
      %190 = vector.load %arg24[%c0_100, %c0_101] : memref<16x32xbf16, #tpu.memory_space<vmem>>, vector<16x32xbf16>
      tpu.vector_store %arg24[%c0_100, %c0_101], %189 {strides = array<i32>} : memref<16x32xbf16, #tpu.memory_space<vmem>>, vector<16x32xbf16>,
      %c0_102 = arith.constant 0 : index
      %c0_103 = arith.constant 0 : index
      %191 = vector.load %arg9[%c0_102, %c0_103] : memref<32x32xbf16, #tpu.memory_space<vmem>>, vector<32x32xbf16>
      %cst_104 = arith.constant dense<0.000000e+00> : vector<16x32xf32>
      %192 = tpu.matmul %180, %191, %cst_104 {dimension_numbers = #tpu.dot_dimension_numbers<[1], [0], [0], [1], [0, 0, 1, 1], [], []>} : vector<16x32xbf16>, vector<32x32xbf16>, vector<16x32xf32> -> vector<16x32xf32>
      %c0_105 = arith.constant 0 : index
      %c0_106 = arith.constant 0 : index
      %193 = vector.load %arg10[%c0_105, %c0_106] : memref<1x32xf32, #tpu.memory_space<vmem>>, vector<1x32xf32>
      %194 = vector.broadcast %193 : vector<1x32xf32> to vector<16x32xf32>
      %195 = arith.addf %192, %194 : vector<16x32xf32>
      %196 = arith.truncf %195 : vector<16x32xf32> to vector<16x32xbf16>
      %c0_107 = arith.constant 0 : index
      %c0_108 = arith.constant 0 : index
      %197 = vector.load %arg25[%c0_107, %c0_108] : memref<16x32xbf16, #tpu.memory_space<vmem>>, vector<16x32xbf16>
      tpu.vector_store %arg25[%c0_107, %c0_108], %196 {strides = array<i32>} : memref<16x32xbf16, #tpu.memory_space<vmem>>, vector<16x32xbf16>,
    } else {
    }
    %c8_i32 = arith.constant 8 : i32
    %3 = arith.muli %arg1, %c8_i32 : i32
    %4 = tpu.assume_multiple %3, 8 : i32
    %c0 = arith.constant 0 : index
    %5 = arith.index_cast %4 : i32 to index
    %c0_1 = arith.constant 0 : index
    %6 = vector.load %arg2[%c0, %5, %c0_1] : memref<1x16x32xbf16, #tpu.memory_space<vmem>>, vector<1x8x32xbf16>
    %7 = vector.shape_cast %6 : vector<1x8x32xbf16> to vector<8x32xbf16>
    %c0_2 = arith.constant 0 : index
    %8 = arith.index_cast %4 : i32 to index
    %c0_3 = arith.constant 0 : index
    %9 = vector.load %arg3[%c0_2, %8, %c0_3] : memref<1x16x32xbf16, #tpu.memory_space<vmem>>, vector<1x8x32xbf16>
    %10 = vector.shape_cast %9 : vector<1x8x32xbf16> to vector<8x32xbf16>
    %11 = arith.addf %7, %10 : vector<8x32xbf16>
    %c0_4 = arith.constant 0 : index
    %c0_5 = arith.constant 0 : index
    %12 = vector.load %arg5[%c0_4, %c0_5] : memref<32x32xbf16, #tpu.memory_space<vmem>>, vector<32x32xbf16>
    %cst = arith.constant dense<0.000000e+00> : vector<8x32xf32>
    %13 = tpu.matmul %11, %12, %cst {dimension_numbers = #tpu.dot_dimension_numbers<[1], [0], [0], [1], [0, 0, 1, 1], [], []>} : vector<8x32xbf16>, vector<32x32xbf16>, vector<8x32xf32> -> vector<8x32xf32>
    %c0_6 = arith.constant 0 : index
    %c0_7 = arith.constant 0 : index
    %14 = vector.load %arg6[%c0_6, %c0_7] : memref<1x32xf32, #tpu.memory_space<vmem>>, vector<1x32xf32>
    %15 = vector.broadcast %14 : vector<1x32xf32> to vector<8x32xf32>
    %16 = arith.addf %13, %15 : vector<8x32xf32>
    %cst_8 = arith.constant 0.353553385 : f32
    %17 = vector.broadcast %cst_8 : f32 to vector<8x32xf32>
    %18 = arith.mulf %16, %17 : vector<8x32xf32>
    %19 = arith.truncf %18 : vector<8x32xf32> to vector<8x32xbf16>
    %c0_9 = arith.constant 0 : index
    %c0_10 = arith.constant 0 : index
    %c0_11 = arith.constant 0 : index
    %20 = vector.load %arg4[%c0_9, %c0_10, %c0_11] : memref<1x1x16xf32, #tpu.memory_space<vmem>>, vector<1x1x16xf32>
    %21 = vector.shape_cast %20 : vector<1x1x16xf32> to vector<1x16xf32>
    %cst_12 = arith.constant -1.000000e+09 : f32
    %22 = vector.broadcast %cst_12 : f32 to vector<1x16xf32>
    %23 = arith.mulf %21, %22 : vector<1x16xf32>
    %c0_13 = arith.constant 0 : index
    %c0_14 = arith.constant 0 : index
    %24 = vector.load %arg24[%c0_13, %c0_14] : memref<16x32xbf16, #tpu.memory_space<vmem>>, vector<16x8xbf16>
    %c0_15 = arith.constant 0 : index
    %c0_16 = arith.constant 0 : index
    %25 = vector.load %arg25[%c0_15, %c0_16] : memref<16x32xbf16, #tpu.memory_space<vmem>>, vector<16x8xbf16>
    %26 = vector.extract_strided_slice %19 {offsets = [0, 0], sizes = [8, 8], strides = [1, 1]} : vector<8x32xbf16> to vector<8x8xbf16>
    %cst_17 = arith.constant dense<0.000000e+00> : vector<8x16xf32>
    %27 = tpu.matmul %26, %24, %cst_17 {dimension_numbers = #tpu.dot_dimension_numbers<[1], [1], [0], [0], [0, 0, 1, 0], [], []>} : vector<8x8xbf16>, vector<16x8xbf16>, vector<8x16xf32> -> vector<8x16xf32>
    %28 = vector.broadcast %23 : vector<1x16xf32> to vector<8x16xf32>
    %29 = arith.addf %27, %28 : vector<8x16xf32>
    %cst_18 = arith.constant dense<0xFF800000> : vector<8xf32>
    %30 = vector.multi_reduction <maximumf>, %29, %cst_18 [1] : vector<8x16xf32> to vector<8xf32>
    %31 = vector.shape_cast %30 : vector<8xf32> to vector<8x1xf32>
    %32 = vector.broadcast %31 : vector<8x1xf32> to vector<8x16xf32>
    %33 = arith.subf %29, %32 : vector<8x16xf32>
    %34 = math.exp %33 : vector<8x16xf32>
    %cst_19 = arith.constant dense<0.000000e+00> : vector<8xf32>
    %35 = vector.multi_reduction <add>, %34, %cst_19 [1] : vector<8x16xf32> to vector<8xf32>
    %36 = vector.shape_cast %35 : vector<8xf32> to vector<8x1xf32>
    %37 = tpu.reciprocal %36 {approx = true} : vector<8x1xf32> -> vector<8x1xf32>
    %38 = vector.broadcast %37 : vector<8x1xf32> to vector<8x16xf32>
    %39 = arith.mulf %34, %38 : vector<8x16xf32>
    %40 = arith.truncf %39 : vector<8x16xf32> to vector<8x16xbf16>
    %cst_20 = arith.constant dense<0.000000e+00> : vector<8x8xf32>
    %41 = tpu.matmul %40, %25, %cst_20 {dimension_numbers = #tpu.dot_dimension_numbers<[1], [0], [0], [1], [0, 0, 1, 1], [], []>} : vector<8x16xbf16>, vector<16x8xbf16>, vector<8x8xf32> -> vector<8x8xf32>
    %42 = arith.truncf %41 : vector<8x8xf32> to vector<8x8xbf16>
    %c0_21 = arith.constant 0 : index
    %c0_22 = arith.constant 0 : index
    %43 = vector.load %arg26[%c0_21, %c0_22] : memref<8x32xbf16, #tpu.memory_space<vmem>>, vector<8x8xbf16>
    tpu.vector_store %arg26[%c0_21, %c0_22], %42 {strides = array<i32>} : memref<8x32xbf16, #tpu.memory_space<vmem>>, vector<8x8xbf16>,
    %c0_23 = arith.constant 0 : index
    %c8 = arith.constant 8 : index
    %44 = vector.load %arg24[%c0_23, %c8] : memref<16x32xbf16, #tpu.memory_space<vmem>>, vector<16x8xbf16>
    %c0_24 = arith.constant 0 : index
    %c8_25 = arith.constant 8 : index
    %45 = vector.load %arg25[%c0_24, %c8_25] : memref<16x32xbf16, #tpu.memory_space<vmem>>, vector<16x8xbf16>
    %46 = vector.extract_strided_slice %19 {offsets = [0, 8], sizes = [8, 8], strides = [1, 1]} : vector<8x32xbf16> to vector<8x8xbf16>
    %cst_26 = arith.constant dense<0.000000e+00> : vector<8x16xf32>
    %47 = tpu.matmul %46, %44, %cst_26 {dimension_numbers = #tpu.dot_dimension_numbers<[1], [1], [0], [0], [0, 0, 1, 0], [], []>} : vector<8x8xbf16>, vector<16x8xbf16>, vector<8x16xf32> -> vector<8x16xf32>
    %48 = vector.broadcast %23 : vector<1x16xf32> to vector<8x16xf32>
    %49 = arith.addf %47, %48 : vector<8x16xf32>
    %cst_27 = arith.constant dense<0xFF800000> : vector<8xf32>
    %50 = vector.multi_reduction <maximumf>, %49, %cst_27 [1] : vector<8x16xf32> to vector<8xf32>
    %51 = vector.shape_cast %50 : vector<8xf32> to vector<8x1xf32>
    %52 = vector.broadcast %51 : vector<8x1xf32> to vector<8x16xf32>
    %53 = arith.subf %49, %52 : vector<8x16xf32>
    %54 = math.exp %53 : vector<8x16xf32>
    %cst_28 = arith.constant dense<0.000000e+00> : vector<8xf32>
    %55 = vector.multi_reduction <add>, %54, %cst_28 [1] : vector<8x16xf32> to vector<8xf32>
    %56 = vector.shape_cast %55 : vector<8xf32> to vector<8x1xf32>
    %57 = tpu.reciprocal %56 {approx = true} : vector<8x1xf32> -> vector<8x1xf32>
    %58 = vector.broadcast %57 : vector<8x1xf32> to vector<8x16xf32>
    %59 = arith.mulf %54, %58 : vector<8x16xf32>
    %60 = arith.truncf %59 : vector<8x16xf32> to vector<8x16xbf16>
    %cst_29 = arith.constant dense<0.000000e+00> : vector<8x8xf32>
    %61 = tpu.matmul %60, %45, %cst_29 {dimension_numbers = #tpu.dot_dimension_numbers<[1], [0], [0], [1], [0, 0, 1, 1], [], []>} : vector<8x16xbf16>, vector<16x8xbf16>, vector<8x8xf32> -> vector<8x8xf32>
    %62 = arith.truncf %61 : vector<8x8xf32> to vector<8x8xbf16>
    %c0_30 = arith.constant 0 : index
    %c8_31 = arith.constant 8 : index
    %63 = vector.load %arg26[%c0_30, %c8_31] : memref<8x32xbf16, #tpu.memory_space<vmem>>, vector<8x8xbf16>
    tpu.vector_store %arg26[%c0_30, %c8_31], %62 {strides = array<i32>} : memref<8x32xbf16, #tpu.memory_space<vmem>>, vector<8x8xbf16>,
    %c0_32 = arith.constant 0 : index
    %c16 = arith.constant 16 : index
    %64 = vector.load %arg24[%c0_32, %c16] : memref<16x32xbf16, #tpu.memory_space<vmem>>, vector<16x8xbf16>
    %c0_33 = arith.constant 0 : index
    %c16_34 = arith.constant 16 : index
    %65 = vector.load %arg25[%c0_33, %c16_34] : memref<16x32xbf16, #tpu.memory_space<vmem>>, vector<16x8xbf16>
    %66 = vector.extract_strided_slice %19 {offsets = [0, 16], sizes = [8, 8], strides = [1, 1]} : vector<8x32xbf16> to vector<8x8xbf16>
    %cst_35 = arith.constant dense<0.000000e+00> : vector<8x16xf32>
    %67 = tpu.matmul %66, %64, %cst_35 {dimension_numbers = #tpu.dot_dimension_numbers<[1], [1], [0], [0], [0, 0, 1, 0], [], []>} : vector<8x8xbf16>, vector<16x8xbf16>, vector<8x16xf32> -> vector<8x16xf32>
    %68 = vector.broadcast %23 : vector<1x16xf32> to vector<8x16xf32>
    %69 = arith.addf %67, %68 : vector<8x16xf32>
    %cst_36 = arith.constant dense<0xFF800000> : vector<8xf32>
    %70 = vector.multi_reduction <maximumf>, %69, %cst_36 [1] : vector<8x16xf32> to vector<8xf32>
    %71 = vector.shape_cast %70 : vector<8xf32> to vector<8x1xf32>
    %72 = vector.broadcast %71 : vector<8x1xf32> to vector<8x16xf32>
    %73 = arith.subf %69, %72 : vector<8x16xf32>
    %74 = math.exp %73 : vector<8x16xf32>
    %cst_37 = arith.constant dense<0.000000e+00> : vector<8xf32>
    %75 = vector.multi_reduction <add>, %74, %cst_37 [1] : vector<8x16xf32> to vector<8xf32>
    %76 = vector.shape_cast %75 : vector<8xf32> to vector<8x1xf32>
    %77 = tpu.reciprocal %76 {approx = true} : vector<8x1xf32> -> vector<8x1xf32>
    %78 = vector.broadcast %77 : vector<8x1xf32> to vector<8x16xf32>
    %79 = arith.mulf %74, %78 : vector<8x16xf32>
    %80 = arith.truncf %79 : vector<8x16xf32> to vector<8x16xbf16>
    %cst_38 = arith.constant dense<0.000000e+00> : vector<8x8xf32>
    %81 = tpu.matmul %80, %65, %cst_38 {dimension_numbers = #tpu.dot_dimension_numbers<[1], [0], [0], [1], [0, 0, 1, 1], [], []>} : vector<8x16xbf16>, vector<16x8xbf16>, vector<8x8xf32> -> vector<8x8xf32>
    %82 = arith.truncf %81 : vector<8x8xf32> to vector<8x8xbf16>
    %c0_39 = arith.constant 0 : index
    %c16_40 = arith.constant 16 : index
    %83 = vector.load %arg26[%c0_39, %c16_40] : memref<8x32xbf16, #tpu.memory_space<vmem>>, vector<8x8xbf16>
    tpu.vector_store %arg26[%c0_39, %c16_40], %82 {strides = array<i32>} : memref<8x32xbf16, #tpu.memory_space<vmem>>, vector<8x8xbf16>,
    %c0_41 = arith.constant 0 : index
    %c24 = arith.constant 24 : index
    %84 = vector.load %arg24[%c0_41, %c24] : memref<16x32xbf16, #tpu.memory_space<vmem>>, vector<16x8xbf16>
    %c0_42 = arith.constant 0 : index
    %c24_43 = arith.constant 24 : index
    %85 = vector.load %arg25[%c0_42, %c24_43] : memref<16x32xbf16, #tpu.memory_space<vmem>>, vector<16x8xbf16>
    %86 = vector.extract_strided_slice %19 {offsets = [0, 24], sizes = [8, 8], strides = [1, 1]} : vector<8x32xbf16> to vector<8x8xbf16>
    %cst_44 = arith.constant dense<0.000000e+00> : vector<8x16xf32>
    %87 = tpu.matmul %86, %84, %cst_44 {dimension_numbers = #tpu.dot_dimension_numbers<[1], [1], [0], [0], [0, 0, 1, 0], [], []>} : vector<8x8xbf16>, vector<16x8xbf16>, vector<8x16xf32> -> vector<8x16xf32>
    %88 = vector.broadcast %23 : vector<1x16xf32> to vector<8x16xf32>
    %89 = arith.addf %87, %88 : vector<8x16xf32>
    %cst_45 = arith.constant dense<0xFF800000> : vector<8xf32>
    %90 = vector.multi_reduction <maximumf>, %89, %cst_45 [1] : vector<8x16xf32> to vector<8xf32>
    %91 = vector.shape_cast %90 : vector<8xf32> to vector<8x1xf32>
    %92 = vector.broadcast %91 : vector<8x1xf32> to vector<8x16xf32>
    %93 = arith.subf %89, %92 : vector<8x16xf32>
    %94 = math.exp %93 : vector<8x16xf32>
    %cst_46 = arith.constant dense<0.000000e+00> : vector<8xf32>
    %95 = vector.multi_reduction <add>, %94, %cst_46 [1] : vector<8x16xf32> to vector<8xf32>
    %96 = vector.shape_cast %95 : vector<8xf32> to vector<8x1xf32>
    %97 = tpu.reciprocal %96 {approx = true} : vector<8x1xf32> -> vector<8x1xf32>
    %98 = vector.broadcast %97 : vector<8x1xf32> to vector<8x16xf32>
    %99 = arith.mulf %94, %98 : vector<8x16xf32>
    %100 = arith.truncf %99 : vector<8x16xf32> to vector<8x16xbf16>
    %cst_47 = arith.constant dense<0.000000e+00> : vector<8x8xf32>
    %101 = tpu.matmul %100, %85, %cst_47 {dimension_numbers = #tpu.dot_dimension_numbers<[1], [0], [0], [1], [0, 0, 1, 1], [], []>} : vector<8x16xbf16>, vector<16x8xbf16>, vector<8x8xf32> -> vector<8x8xf32>
    %102 = arith.truncf %101 : vector<8x8xf32> to vector<8x8xbf16>
    %c0_48 = arith.constant 0 : index
    %c24_49 = arith.constant 24 : index
    %103 = vector.load %arg26[%c0_48, %c24_49] : memref<8x32xbf16, #tpu.memory_space<vmem>>, vector<8x8xbf16>
    tpu.vector_store %arg26[%c0_48, %c24_49], %102 {strides = array<i32>} : memref<8x32xbf16, #tpu.memory_space<vmem>>, vector<8x8xbf16>,
    %c0_50 = arith.constant 0 : index
    %c0_51 = arith.constant 0 : index
    %104 = vector.load %arg26[%c0_50, %c0_51] : memref<8x32xbf16, #tpu.memory_space<vmem>>, vector<8x32xbf16>
    %c0_52 = arith.constant 0 : index
    %c0_53 = arith.constant 0 : index
    %105 = vector.load %arg11[%c0_52, %c0_53] : memref<32x32xbf16, #tpu.memory_space<vmem>>, vector<32x32xbf16>
    %cst_54 = arith.constant dense<0.000000e+00> : vector<8x32xf32>
    %106 = tpu.matmul %104, %105, %cst_54 {dimension_numbers = #tpu.dot_dimension_numbers<[1], [0], [0], [1], [0, 0, 1, 1], [], []>} : vector<8x32xbf16>, vector<32x32xbf16>, vector<8x32xf32> -> vector<8x32xf32>
    %c0_55 = arith.constant 0 : index
    %c0_56 = arith.constant 0 : index
    %107 = vector.load %arg12[%c0_55, %c0_56] : memref<1x32xf32, #tpu.memory_space<vmem>>, vector<1x32xf32>
    %108 = vector.broadcast %107 : vector<1x32xf32> to vector<8x32xf32>
    %109 = arith.addf %106, %108 : vector<8x32xf32>
    %110 = arith.extf %7 : vector<8x32xbf16> to vector<8x32xf32>
    %111 = arith.addf %110, %109 : vector<8x32xf32>
    %c0_57 = arith.constant 0 : index
    %c0_58 = arith.constant 0 : index
    %112 = vector.load %arg13[%c0_57, %c0_58] : memref<1x32xf32, #tpu.memory_space<vmem>>, vector<1x32xf32>
    %c0_59 = arith.constant 0 : index
    %c0_60 = arith.constant 0 : index
    %113 = vector.load %arg14[%c0_59, %c0_60] : memref<1x32xf32, #tpu.memory_space<vmem>>, vector<1x32xf32>
    %cst_61 = arith.constant dense<0.000000e+00> : vector<8xf32>
    %114 = vector.multi_reduction <add>, %111, %cst_61 [1] : vector<8x32xf32> to vector<8xf32>
    %115 = vector.shape_cast %114 : vector<8xf32> to vector<8x1xf32>
    %cst_62 = arith.constant 3.200000e+01 : f32
    %116 = vector.broadcast %cst_62 : f32 to vector<8x1xf32>
    %117 = arith.divf %115, %116 : vector<8x1xf32>
    %118 = vector.broadcast %117 : vector<8x1xf32> to vector<8x32xf32>
    %119 = arith.subf %111, %118 : vector<8x32xf32>
    %120 = arith.mulf %119, %119 : vector<8x32xf32>
    %cst_63 = arith.constant dense<0.000000e+00> : vector<8xf32>
    %121 = vector.multi_reduction <add>, %120, %cst_63 [1] : vector<8x32xf32> to vector<8xf32>
    %122 = vector.shape_cast %121 : vector<8xf32> to vector<8x1xf32>
    %cst_64 = arith.constant 3.200000e+01 : f32
    %123 = vector.broadcast %cst_64 : f32 to vector<8x1xf32>
    %124 = arith.divf %122, %123 : vector<8x1xf32>
    %125 = vector.broadcast %117 : vector<8x1xf32> to vector<8x32xf32>
    %126 = arith.subf %111, %125 : vector<8x32xf32>
    %cst_65 = arith.constant 9.99999974E-6 : f32
    %127 = vector.broadcast %cst_65 : f32 to vector<8x1xf32>
    %128 = arith.addf %124, %127 : vector<8x1xf32>
    %129 = math.rsqrt %128 : vector<8x1xf32>
    %130 = vector.broadcast %129 : vector<8x1xf32> to vector<8x32xf32>
    %131 = arith.mulf %126, %130 : vector<8x32xf32>
    %132 = vector.broadcast %112 : vector<1x32xf32> to vector<8x32xf32>
    %133 = arith.mulf %131, %132 : vector<8x32xf32>
    %134 = vector.broadcast %113 : vector<1x32xf32> to vector<8x32xf32>
    %135 = arith.addf %133, %134 : vector<8x32xf32>
    %136 = arith.truncf %135 : vector<8x32xf32> to vector<8x32xbf16>
    %c0_66 = arith.constant 0 : index
    %c0_67 = arith.constant 0 : index
    %137 = vector.load %arg15[%c0_66, %c0_67] : memref<32x64xbf16, #tpu.memory_space<vmem>>, vector<32x64xbf16>
    %cst_68 = arith.constant dense<0.000000e+00> : vector<8x64xf32>
    %138 = tpu.matmul %136, %137, %cst_68 {dimension_numbers = #tpu.dot_dimension_numbers<[1], [0], [0], [1], [0, 0, 1, 1], [], []>} : vector<8x32xbf16>, vector<32x64xbf16>, vector<8x64xf32> -> vector<8x64xf32>
    %c0_69 = arith.constant 0 : index
    %c0_70 = arith.constant 0 : index
    %139 = vector.load %arg16[%c0_69, %c0_70] : memref<1x64xf32, #tpu.memory_space<vmem>>, vector<1x64xf32>
    %140 = vector.broadcast %139 : vector<1x64xf32> to vector<8x64xf32>
    %141 = arith.addf %138, %140 : vector<8x64xf32>
    %cst_71 = arith.constant 0.000000e+00 : f32
    %142 = vector.broadcast %cst_71 : f32 to vector<8x64xf32>
    %143 = arith.maximumf %141, %142 : vector<8x64xf32>
    %144 = arith.truncf %143 : vector<8x64xf32> to vector<8x64xbf16>
    %c0_72 = arith.constant 0 : index
    %c0_73 = arith.constant 0 : index
    %145 = vector.load %arg17[%c0_72, %c0_73] : memref<64x32xbf16, #tpu.memory_space<vmem>>, vector<64x32xbf16>
    %cst_74 = arith.constant dense<0.000000e+00> : vector<8x32xf32>
    %146 = tpu.matmul %144, %145, %cst_74 {dimension_numbers = #tpu.dot_dimension_numbers<[1], [0], [0], [1], [0, 0, 1, 1], [], []>} : vector<8x64xbf16>, vector<64x32xbf16>, vector<8x32xf32> -> vector<8x32xf32>
    %c0_75 = arith.constant 0 : index
    %c0_76 = arith.constant 0 : index
    %147 = vector.load %arg18[%c0_75, %c0_76] : memref<1x32xf32, #tpu.memory_space<vmem>>, vector<1x32xf32>
    %148 = vector.broadcast %147 : vector<1x32xf32> to vector<8x32xf32>
    %149 = arith.addf %146, %148 : vector<8x32xf32>
    %150 = arith.addf %135, %149 : vector<8x32xf32>
    %c0_77 = arith.constant 0 : index
    %c0_78 = arith.constant 0 : index
    %151 = vector.load %arg19[%c0_77, %c0_78] : memref<1x32xf32, #tpu.memory_space<vmem>>, vector<1x32xf32>
    %c0_79 = arith.constant 0 : index
    %c0_80 = arith.constant 0 : index
    %152 = vector.load %arg20[%c0_79, %c0_80] : memref<1x32xf32, #tpu.memory_space<vmem>>, vector<1x32xf32>
    %cst_81 = arith.constant dense<0.000000e+00> : vector<8xf32>
    %153 = vector.multi_reduction <add>, %150, %cst_81 [1] : vector<8x32xf32> to vector<8xf32>
    %154 = vector.shape_cast %153 : vector<8xf32> to vector<8x1xf32>
    %cst_82 = arith.constant 3.200000e+01 : f32
    %155 = vector.broadcast %cst_82 : f32 to vector<8x1xf32>
    %156 = arith.divf %154, %155 : vector<8x1xf32>
    %157 = vector.broadcast %156 : vector<8x1xf32> to vector<8x32xf32>
    %158 = arith.subf %150, %157 : vector<8x32xf32>
    %159 = arith.mulf %158, %158 : vector<8x32xf32>
    %cst_83 = arith.constant dense<0.000000e+00> : vector<8xf32>
    %160 = vector.multi_reduction <add>, %159, %cst_83 [1] : vector<8x32xf32> to vector<8xf32>
    %161 = vector.shape_cast %160 : vector<8xf32> to vector<8x1xf32>
    %cst_84 = arith.constant 3.200000e+01 : f32
    %162 = vector.broadcast %cst_84 : f32 to vector<8x1xf32>
    %163 = arith.divf %161, %162 : vector<8x1xf32>
    %164 = vector.broadcast %156 : vector<8x1xf32> to vector<8x32xf32>
    %165 = arith.subf %150, %164 : vector<8x32xf32>
    %cst_85 = arith.constant 9.99999974E-6 : f32
    %166 = vector.broadcast %cst_85 : f32 to vector<8x1xf32>
    %167 = arith.addf %163, %166 : vector<8x1xf32>
    %168 = math.rsqrt %167 : vector<8x1xf32>
    %169 = vector.broadcast %168 : vector<8x1xf32> to vector<8x32xf32>
    %170 = arith.mulf %165, %169 : vector<8x32xf32>
    %171 = vector.broadcast %151 : vector<1x32xf32> to vector<8x32xf32>
    %172 = arith.mulf %170, %171 : vector<8x32xf32>
    %173 = vector.broadcast %152 : vector<1x32xf32> to vector<8x32xf32>
    %174 = arith.addf %172, %173 : vector<8x32xf32>
    %175 = arith.truncf %174 : vector<8x32xf32> to vector<8x32xbf16>
    %c0_86 = arith.constant 0 : index
    %c0_87 = arith.constant 0 : index
    %c0_88 = arith.constant 0 : index
    %176 = vector.load %arg23[%c0_86, %c0_87, %c0_88] : memref<1x8x32xbf16, #tpu.memory_space<vmem>>, vector<1x8x32xbf16>
    %177 = vector.shape_cast %176 : vector<1x8x32xbf16> to vector<8x32xbf16>
    %178 = vector.shape_cast %175 : vector<8x32xbf16> to vector<1x8x32xbf16>
    tpu.vector_store %arg23[%c0_86, %c0_87, %c0_88], %178 {strides = array<i32>} : memref<1x8x32xbf16, #tpu.memory_space<vmem>>, vector<1x8x32xbf16>,
    return
  }
  func.func @transform_0(%arg0: i32, %arg1: i32) -> (i32, i32, i32) {
    %c0_i32 = arith.constant 0 : i32
    %c0_i32_0 = arith.constant 0 : i32
    %c0_i32_1 = arith.constant 0 : i32
    return %arg0, %c0_i32, %c0_i32_0 : i32, i32, i32
  }
  func.func @transform_1(%arg0: i32, %arg1: i32) -> (i32, i32, i32) {
    %c0_i32 = arith.constant 0 : i32
    %c0_i32_0 = arith.constant 0 : i32
    %c0_i32_1 = arith.constant 0 : i32
    return %arg0, %c0_i32, %c0_i32_0 : i32, i32, i32
  }
  func.func @transform_2(%arg0: i32, %arg1: i32) -> (i32, i32, i32) {
    %c0_i32 = arith.constant 0 : i32
    %c0_i32_0 = arith.constant 0 : i32
    %c0_i32_1 = arith.constant 0 : i32
    return %arg0, %c0_i32, %c0_i32_0 : i32, i32, i32
  }
  func.func @transform_3(%arg0: i32, %arg1: i32) -> (i32, i32) {
    %c0_i32 = arith.constant 0 : i32
    %c0_i32_0 = arith.constant 0 : i32
    %c0_i32_1 = arith.constant 0 : i32
    return %c0_i32, %c0_i32_0 : i32, i32
  }
  func.func @transform_4(%arg0: i32, %arg1: i32) -> (i32, i32) {
    %c0_i32 = arith.constant 0 : i32
    %c0_i32_0 = arith.constant 0 : i32
    %c0_i32_1 = arith.constant 0 : i32
    return %c0_i32, %c0_i32_0 : i32, i32
  }
  func.func @transform_5(%arg0: i32, %arg1: i32) -> (i32, i32) {
    %c0_i32 = arith.constant 0 : i32
    %c0_i32_0 = arith.constant 0 : i32
    %c0_i32_1 = arith.constant 0 : i32
    return %c0_i32, %c0_i32_0 : i32, i32
  }
  func.func @transform_6(%arg0: i32, %arg1: i32) -> (i32, i32) {
    %c0_i32 = arith.constant 0 : i32
    %c0_i32_0 = arith.constant 0 : i32
    %c0_i32_1 = arith.constant 0 : i32
    return %c0_i32, %c0_i32_0 : i32, i32
  }
  func.func @transform_7(%arg0: i32, %arg1: i32) -> (i32, i32) {
    %c0_i32 = arith.constant 0 : i32
    %c0_i32_0 = arith.constant 0 : i32
    %c0_i32_1 = arith.constant 0 : i32
    return %c0_i32, %c0_i32_0 : i32, i32
  }
  func.func @transform_8(%arg0: i32, %arg1: i32) -> (i32, i32) {
    %c0_i32 = arith.constant 0 : i32
    %c0_i32_0 = arith.constant 0 : i32
    %c0_i32_1 = arith.constant 0 : i32
    return %c0_i32, %c0_i32_0 : i32, i32
  }
  func.func @transform_9(%arg0: i32, %arg1: i32) -> (i32, i32) {
    %c0_i32 = arith.constant 0 : i32
    %c0_i32_0 = arith.constant 0 : i32
    %c0_i32_1 = arith.constant 0 : i32
    return %c0_i32, %c0_i32_0 : i32, i32
  }
  func.func @transform_10(%arg0: i32, %arg1: i32) -> (i32, i32) {
    %c0_i32 = arith.constant 0 : i32
    %c0_i32_0 = arith.constant 0 : i32
    %c0_i32_1 = arith.constant 0 : i32
    return %c0_i32, %c0_i32_0 : i32, i32
  }
  func.func @transform_11(%arg0: i32, %arg1: i32) -> (i32, i32) {
    %c0_i32 = arith.constant 0 : i32
    %c0_i32_0 = arith.constant 0 : i32
    %c0_i32_1 = arith.constant 0 : i32
    return %c0_i32, %c0_i32_0 : i32, i32
  }
  func.func @transform_12(%arg0: i32, %arg1: i32) -> (i32, i32) {
    %c0_i32 = arith.constant 0 : i32
    %c0_i32_0 = arith.constant 0 : i32
    %c0_i32_1 = arith.constant 0 : i32
    return %c0_i32, %c0_i32_0 : i32, i32
  }
  func.func @transform_13(%arg0: i32, %arg1: i32) -> (i32, i32) {
    %c0_i32 = arith.constant 0 : i32
    %c0_i32_0 = arith.constant 0 : i32
    %c0_i32_1 = arith.constant 0 : i32
    return %c0_i32, %c0_i32_0 : i32, i32
  }
  func.func @transform_14(%arg0: i32, %arg1: i32) -> (i32, i32) {
    %c0_i32 = arith.constant 0 : i32
    %c0_i32_0 = arith.constant 0 : i32
    %c0_i32_1 = arith.constant 0 : i32
    return %c0_i32, %c0_i32_0 : i32, i32
  }
  func.func @transform_15(%arg0: i32, %arg1: i32) -> (i32, i32) {
    %c0_i32 = arith.constant 0 : i32
    %c0_i32_0 = arith.constant 0 : i32
    %c0_i32_1 = arith.constant 0 : i32
    return %c0_i32, %c0_i32_0 : i32, i32
  }
  func.func @transform_16(%arg0: i32, %arg1: i32) -> (i32, i32) {
    %c0_i32 = arith.constant 0 : i32
    %c0_i32_0 = arith.constant 0 : i32
    %c0_i32_1 = arith.constant 0 : i32
    return %c0_i32, %c0_i32_0 : i32, i32
  }
  func.func @transform_17(%arg0: i32, %arg1: i32) -> (i32, i32) {
    %c0_i32 = arith.constant 0 : i32
    %c0_i32_0 = arith.constant 0 : i32
    %c0_i32_1 = arith.constant 0 : i32
    return %c0_i32, %c0_i32_0 : i32, i32
  }
  func.func @transform_18(%arg0: i32, %arg1: i32) -> (i32, i32) {
    %c0_i32 = arith.constant 0 : i32
    %c0_i32_0 = arith.constant 0 : i32
    %c0_i32_1 = arith.constant 0 : i32
    return %c0_i32, %c0_i32_0 : i32, i32
  }
  func.func @transform_19(%arg0: i32, %arg1: i32) -> (i32, i32) {
    %c0_i32 = arith.constant 0 : i32
    %c0_i32_0 = arith.constant 0 : i32
    %c0_i32_1 = arith.constant 0 : i32
    return %c0_i32, %c0_i32_0 : i32, i32
  }
  func.func @transform_20(%arg0: i32, %arg1: i32) -> (i32, i32) {
    %c0_i32 = arith.constant 0 : i32
    %c0_i32_0 = arith.constant 0 : i32
    %c0_i32_1 = arith.constant 0 : i32
    return %c0_i32, %c0_i32_0 : i32, i32
  }
  func.func @transform_21(%arg0: i32, %arg1: i32) -> (i32, i32, i32) {
    %c0_i32 = arith.constant 0 : i32
    %c0_i32_0 = arith.constant 0 : i32
    return %arg0, %arg1, %c0_i32 : i32, i32, i32
  }
}

</mosaic_0001>

<llo_original>
// kernel: tpu_custom_call.1
$region0: #{tpu_custom_call.1}
  #allocation0 [shape = 'u32[]', space=smem, size = 0x4, offset = 0x4, fixed_abs, tag = 'smem constant byte address 0x4 - core index']
  #allocation1 [shape = 'u32[144,128]{1,0:T(1,128)}', space=vmem, size = 0x12000, scoped, tag = 'internal scratch']
  #allocation2 [shape = 'bf16[16,32]{1,0:T(16,128)(2,1)}', space=vmem, size = 0x1000, scoped, tag = 'scratch operand']
  #allocation3 [shape = 'bf16[16,32]{1,0:T(16,128)(2,1)}', space=vmem, size = 0x1000, scoped, tag = 'scratch operand']
  #allocation4 [shape = 'bf16[8,32]{1,0:T(8,128)(2,1)}', space=vmem, size = 0x800, scoped, tag = 'scratch operand']
  %s0 = inlined_call_operand.vmem [shape: bf16[2,16,32], index: 0, kind: input, shape index: {}]
  %s1 = inlined_call_operand.vmem [shape: bf16[2,16,32], index: 1, kind: input, shape index: {}]
  %s2 = inlined_call_operand.hbm [shape: f32[2,1,16], index: 2, kind: input, shape index: {}]
  %s3 = inlined_call_operand.vmem [shape: bf16[32,32], index: 3, kind: input, shape index: {}]
  %s4 = inlined_call_operand.vmem [shape: f32[1,32], index: 4, kind: input, shape index: {}]
  %s5 = inlined_call_operand.hbm [shape: bf16[32,32], index: 5, kind: input, shape index: {}]
  %s6 = inlined_call_operand.hbm [shape: f32[1,32], index: 6, kind: input, shape index: {}]
  %s7 = inlined_call_operand.hbm [shape: bf16[32,32], index: 7, kind: input, shape index: {}]
  %s8 = inlined_call_operand.hbm [shape: f32[1,32], index: 8, kind: input, shape index: {}]
  %s9 = inlined_call_operand.vmem [shape: bf16[32,32], index: 9, kind: input, shape index: {}]
  %s10 = inlined_call_operand.hbm [shape: f32[1,32], index: 10, kind: input, shape index: {}]
  %s11 = inlined_call_operand.hbm [shape: f32[1,32], index: 11, kind: input, shape index: {}]
  %s12 = inlined_call_operand.hbm [shape: f32[1,32], index: 12, kind: input, shape index: {}]
  %s13 = inlined_call_operand.vmem [shape: bf16[32,64], index: 13, kind: input, shape index: {}]
  %s14 = inlined_call_operand.vmem [shape: f32[1,64], index: 14, kind: input, shape index: {}]
  %s15 = inlined_call_operand.vmem [shape: bf16[64,32], index: 15, kind: input, shape index: {}]
  %s16 = inlined_call_operand.vmem [shape: f32[1,32], index: 16, kind: input, shape index: {}]
  %s17 = inlined_call_operand.vmem [shape: f32[1,32], index: 17, kind: input, shape index: {}]
  %s18 = inlined_call_operand.vmem [shape: f32[1,32], index: 18, kind: input, shape index: {}]
  %s19 = inlined_call_operand.vmem [shape: f32[1,32], index: 19, kind: input, shape index: {}]
  %s20 = inlined_call_operand.vmem [shape: f32[1,32], index: 20, kind: input, shape index: {}]
  %s21 = inlined_call_operand.hbm [shape: bf16[2,16,32], index: 21, kind: output, shape index: {}]
  %s22 = sld [smem:[#allocation0]]
  $region153: #{tpu_custom_call.1} parent=0
    _
  %s24 = ssub.s32 1, %s22
  %s25 = scalar_select 0, %s24, %s22
  $region1: #{tpu_custom_call.1} parent=0
    #allocation5 [shape = 'u8[1024]{0}', space=vmem, size = 0x400, scoped, tag = 'input window, operand 2']
    #allocation6 [shape = 's32[2]{0}', space=sflag, size = 0x8, scoped, tag = 'scoped memory for tpu_custom_call.1']
    #allocation7 [shape = 's32[2]{0}', space=sflag, size = 0x8, scoped, tag = 'scoped memory for tpu_custom_call.1']
    #allocation8 [shape = 'u8[8192]{0}', space=vmem, size = 0x2000, scoped, tag = 'input window, operand 5, single buffered']
    #allocation9 [shape = 's32[1]{0}', space=sflag, size = 0x4, scoped, tag = 'scoped memory for tpu_custom_call.1']
    #allocation10 [shape = 'u8[512]{0}', space=vmem, size = 0x400, scoped, tag = 'input window, operand 6, single buffered']
    #allocation11 [shape = 'u8[8192]{0}', space=vmem, size = 0x2000, scoped, tag = 'input window, operand 7, single buffered']
    #allocation12 [shape = 's32[1]{0}', space=sflag, size = 0x4, scoped, tag = 'scoped memory for tpu_custom_call.1']
    #allocation13 [shape = 'u8[512]{0}', space=vmem, size = 0x400, scoped, tag = 'input window, operand 8, single buffered']
    #allocation14 [shape = 'u8[512]{0}', space=vmem, size = 0x400, scoped, tag = 'input window, operand 10, single buffered']
    #allocation15 [shape = 's32[1]{0}', space=sflag, size = 0x4, scoped, tag = 'scoped memory for tpu_custom_call.1']
    #allocation16 [shape = 'u8[512]{0}', space=vmem, size = 0x400, scoped, tag = 'input window, operand 11, single buffered']
    #allocation17 [shape = 'u8[512]{0}', space=vmem, size = 0x400, scoped, tag = 'input window, operand 12, single buffered']
    #allocation18 [shape = 's32[1]{0}', space=sflag, size = 0x4, scoped, tag = 'scoped memory for tpu_custom_call.1']
    #allocation19 [shape = 'u8[4096]{0}', space=vmem, size = 0x1000, scoped, tag = 'output window, operand 0']
    %26 = vsyncpa [#allocation6], 0
    %s27 = scalar_lea.sflag [#allocation6], 1
    %28 = vsyncpa %s27, 0
    %29 = vsyncpa [#allocation9], 0
    %30 = vsyncpa [#allocation12], 0
    %31 = vsyncpa [#allocation15], 0
    %32 = vsyncpa [#allocation18], 0
    %33 = vsyncpa [#allocation7], 0
    %s34 = scalar_lea.sflag [#allocation7], 1
    %35 = vsyncpa %s34, 0
    loop: start=0, step=1, limit=6
    $region2: #{tpu_custom_call.1} parent=1 // loop_pre_header
      _
    $region3: #{tpu_custom_call.1} parent=1 // loop_header
      %s37 = sphi 0, %s41
      %p38 = scmp.ge.s32.totalorder %s37, 6
      %s44 = sphi 0, %s56
      %s45 = sphi 0, %s52
      %s46 = sphi 0, %s44
      %s47 = sphi 0, %s45
      %s48 = sphi 0, %s46
      %s49 = sphi 0, %s47
      %s59 = sphi 0, %s61
      %s62 = sphi 0, %s59
      %s63 = sphi 0, %s62
      %s79 = sphi 0, %s63
      %s85 = sphi 0, %s87
      %s88 = sphi 0, %s85
      %s89 = sphi 0, %s88
      %s105 = sphi 0, %s89
      %s111 = sphi 0, %s113
      %s114 = sphi 0, %s111
      %s115 = sphi 0, %s114
      %s131 = sphi 0, %s115
      %s135 = sphi 0, %s135
      %s137 = sphi 0, %s135
      %s138 = sphi 0, %s137
      %s152 = sphi 0, %s138
      %s156 = sphi 0, %s156
      %s158 = sphi 0, %s156
      %s159 = sphi 0, %s158
      %s173 = sphi 0, %s159
      %s177 = sphi 0, %s177
      %s179 = sphi 0, %s177
      %s180 = sphi 0, %s179
      %s194 = sphi 0, %s180
      %s198 = sphi 0, %s198
      %s200 = sphi 0, %s198
      %s201 = sphi 0, %s200
      %s215 = sphi 0, %s201
      %s219 = sphi 0, %s219
      %s221 = sphi 0, %s219
      %s222 = sphi 0, %s221
      %s236 = sphi 0, %s222
      %s240 = sphi 0, %s240
      %s242 = sphi 0, %s240
      %s243 = sphi 0, %s242
      %s257 = sphi 0, %s243
      %s261 = sphi 0, %s261
      %s263 = sphi 0, %s261
      %s264 = sphi 0, %s263
      %s278 = sphi 0, %s264
      %s282 = sphi 0, %s282
      %s284 = sphi 0, %s282
      %s285 = sphi 0, %s284
      %s299 = sphi 0, %s285
      %s303 = sphi 0, %s303
      %s305 = sphi 0, %s303
      %s306 = sphi 0, %s305
      %s320 = sphi 0, %s306
      %s324 = sphi 0, %s324
      %s326 = sphi 0, %s324
      %s327 = sphi 0, %s326
      %s341 = sphi 0, %s327
      %s345 = sphi 0, %s345
      %s347 = sphi 0, %s345
      %s348 = sphi 0, %s347
      %s362 = sphi 0, %s348
      %s366 = sphi 0, %s366
      %s368 = sphi 0, %s366
      %s369 = sphi 0, %s368
      %s383 = sphi 0, %s369
      %s387 = sphi 0, %s387
      %s389 = sphi 0, %s387
      %s390 = sphi 0, %s389
      %s404 = sphi 0, %s390
      %s408 = sphi 0, %s408
      %s410 = sphi 0, %s408
      %s411 = sphi 0, %s410
      %s425 = sphi 0, %s411
      %s429 = sphi 0, %s429
      %s431 = sphi 0, %s429
      %s432 = sphi 0, %s431
      %s446 = sphi 0, %s432
      %s450 = sphi 0, %s450
      %s452 = sphi 0, %s450
      %s453 = sphi 0, %s452
      %s467 = sphi 0, %s453
      %s471 = sphi 0, %s471
      %s473 = sphi 0, %s471
      %s474 = sphi 0, %s473
      %s488 = sphi 0, %s474
      %s492 = sphi 0, %s492
      %s494 = sphi 0, %s492
      %s495 = sphi 0, %s494
      %s509 = sphi 0, %s495
      %s517 = sphi 0, %s519
      %s520 = sphi 0, %s517
      %s521 = sphi 0, %s520
      %s537 = sphi 0, %s521
    $region4: #{tpu_custom_call.1} parent=1 // loop_header_branch
      %40 = sbr.rel (%p38) target = $region8
    $region5: #{tpu_custom_call.1} parent=1 // loop_body
      %s42 = ssub.s32 %s37, 1
      %s43 = ssub.s32 %s37, 2
      %s50 = sadd.s32 1, %s45
      %p51 = scmp.ge.s32.totalorder %s50, 2
      %s52 = scalar_select %p51, 0, %s50
      %s53 = sadd.s32 1, %s44
      %s54 = scalar_select %p51, %s53, %s44
      %p55 = scmp.ge.s32.totalorder %s54, 2
      %s56 = scalar_select %p55, 0, %s54
      %s57 = ssub.s32 %s44, %s56
      %p58 = scmp.eq.s32.totalorder %s57, 0
      %s60 = sadd.s32 %s59, 1
      %s61 = scalar_select %p58, %s59, %s60
      %p64 = pneg %p58
      %p65 = scmp.eq.s32.totalorder %s37, 3
      %p66 = por %p64, %p65
      %p67 = scmp.ne.s32.totalorder %s59, %s62
      %p68 = scmp.eq.s32.totalorder %s37, 0
      %p69 = por %p67, %p68
      %p70 = scmp.ne.s32.totalorder %s59, %s62
      %p71 = scmp.eq.s32.totalorder %s42, 3
      %p72 = por %p70, %p71
      %p73 = scmp.ne.s32.totalorder %s62, %s63
      %p74 = scmp.eq.s32.totalorder %s42, 0
      %p75 = por %p73, %p74
      %p76 = scmp.ne.s32.totalorder %s62, %s63
      %p77 = scmp.eq.s32.totalorder %s43, 3
      %p78 = por %p76, %p77
      %p80 = scmp.ne.s32.totalorder %s63, %s79
      %p81 = scmp.eq.s32.totalorder %s43, 0
      %p82 = por %p80, %p81
      %s83 = ssub.s32 %s44, %s56
      %p84 = scmp.eq.s32.totalorder %s83, 0
      %s86 = sadd.s32 %s85, 1
      %s87 = scalar_select %p84, %s85, %s86
      %p90 = pneg %p84
      %p91 = scmp.eq.s32.totalorder %s37, 3
      %p92 = por %p90, %p91
      %p93 = scmp.ne.s32.totalorder %s85, %s88
      %p94 = scmp.eq.s32.totalorder %s37, 0
      %p95 = por %p93, %p94
      %p96 = scmp.ne.s32.totalorder %s85, %s88
      %p97 = scmp.eq.s32.totalorder %s42, 3
      %p98 = por %p96, %p97
      %p99 = scmp.ne.s32.totalorder %s88, %s89
      %p100 = scmp.eq.s32.totalorder %s42, 0
      %p101 = por %p99, %p100
      %p102 = scmp.ne.s32.totalorder %s88, %s89
      %p103 = scmp.eq.s32.totalorder %s43, 3
      %p104 = por %p102, %p103
      %p106 = scmp.ne.s32.totalorder %s89, %s105
      %p107 = scmp.eq.s32.totalorder %s43, 0
      %p108 = por %p106, %p107
      %s109 = ssub.s32 %s44, %s56
      %p110 = scmp.eq.s32.totalorder %s109, 0
      %s112 = sadd.s32 %s111, 1
      %s113 = scalar_select %p110, %s111, %s112
      %p116 = pneg %p110
      %p117 = scmp.eq.s32.totalorder %s37, 3
      %p118 = por %p116, %p117
      %p119 = scmp.ne.s32.totalorder %s111, %s114
      %p120 = scmp.eq.s32.totalorder %s37, 0
      %p121 = por %p119, %p120
      %p122 = scmp.ne.s32.totalorder %s111, %s114
      %p123 = scmp.eq.s32.totalorder %s42, 3
      %p124 = por %p122, %p123
      %p125 = scmp.ne.s32.totalorder %s114, %s115
      %p126 = scmp.eq.s32.totalorder %s42, 0
      %p127 = por %p125, %p126
      %p128 = scmp.ne.s32.totalorder %s114, %s115
      %p129 = scmp.eq.s32.totalorder %s43, 3
      %p130 = por %p128, %p129
      %p132 = scmp.ne.s32.totalorder %s115, %s131
      %p133 = scmp.eq.s32.totalorder %s43, 0
      %p134 = por %p132, %p133
      %s136 = sadd.s32 %s135, 1
      %p139 = scmp.eq.s32.totalorder %s37, 3
      %p140 = scmp.ne.s32.totalorder %s135, %s137
      %p141 = scmp.eq.s32.totalorder %s37, 0
      %p142 = por %p140, %p141
      %p143 = scmp.ne.s32.totalorder %s135, %s137
      %p144 = scmp.eq.s32.totalorder %s42, 3
      %p145 = por %p143, %p144
      %p146 = scmp.ne.s32.totalorder %s137, %s138
      %p147 = scmp.eq.s32.totalorder %s42, 0
      %p148 = por %p146, %p147
      %p149 = scmp.ne.s32.totalorder %s137, %s138
      %p150 = scmp.eq.s32.totalorder %s43, 3
      %p151 = por %p149, %p150
      %p153 = scmp.ne.s32.totalorder %s138, %s152
      %p154 = scmp.eq.s32.totalorder %s43, 0
      %p155 = por %p153, %p154
      %s157 = sadd.s32 %s156, 1
      %p160 = scmp.eq.s32.totalorder %s37, 3
      %p161 = scmp.ne.s32.totalorder %s156, %s158
      %p162 = scmp.eq.s32.totalorder %s37, 0
      %p163 = por %p161, %p162
      %p164 = scmp.ne.s32.totalorder %s156, %s158
      %p165 = scmp.eq.s32.totalorder %s42, 3
      %p166 = por %p164, %p165
      %p167 = scmp.ne.s32.totalorder %s158, %s159
      %p168 = scmp.eq.s32.totalorder %s42, 0
      %p169 = por %p167, %p168
      %p170 = scmp.ne.s32.totalorder %s158, %s159
      %p171 = scmp.eq.s32.totalorder %s43, 3
      %p172 = por %p170, %p171
      %p174 = scmp.ne.s32.totalorder %s159, %s173
      %p175 = scmp.eq.s32.totalorder %s43, 0
      %p176 = por %p174, %p175
      %s178 = sadd.s32 %s177, 1
      %p181 = scmp.eq.s32.totalorder %s37, 3
      %p182 = scmp.ne.s32.totalorder %s177, %s179
      %p183 = scmp.eq.s32.totalorder %s37, 0
      %p184 = por %p182, %p183
      %p185 = scmp.ne.s32.totalorder %s177, %s179
      %p186 = scmp.eq.s32.totalorder %s42, 3
      %p187 = por %p185, %p186
      %p188 = scmp.ne.s32.totalorder %s179, %s180
      %p189 = scmp.eq.s32.totalorder %s42, 0
      %p190 = por %p188, %p189
      %p191 = scmp.ne.s32.totalorder %s179, %s180
      %p192 = scmp.eq.s32.totalorder %s43, 3
      %p193 = por %p191, %p192
      %p195 = scmp.ne.s32.totalorder %s180, %s194
      %p196 = scmp.eq.s32.totalorder %s43, 0
      %p197 = por %p195, %p196
      %s199 = sadd.s32 %s198, 1
      %p202 = scmp.eq.s32.totalorder %s37, 3
      %p203 = scmp.ne.s32.totalorder %s198, %s200
      %p204 = scmp.eq.s32.totalorder %s37, 0
      %p205 = por %p203, %p204
      %p206 = scmp.ne.s32.totalorder %s198, %s200
      %p207 = scmp.eq.s32.totalorder %s42, 3
      %p208 = por %p206, %p207
      %p209 = scmp.ne.s32.totalorder %s200, %s201
      %p210 = scmp.eq.s32.totalorder %s42, 0
      %p211 = por %p209, %p210
      %p212 = scmp.ne.s32.totalorder %s200, %s201
      %p213 = scmp.eq.s32.totalorder %s43, 3
      %p214 = por %p212, %p213
      %p216 = scmp.ne.s32.totalorder %s201, %s215
      %p217 = scmp.eq.s32.totalorder %s43, 0
      %p218 = por %p216, %p217
      %s220 = sadd.s32 %s219, 1
      %p223 = scmp.eq.s32.totalorder %s37, 3
      %p224 = scmp.ne.s32.totalorder %s219, %s221
      %p225 = scmp.eq.s32.totalorder %s37, 0
      %p226 = por %p224, %p225
      %p227 = scmp.ne.s32.totalorder %s219, %s221
      %p228 = scmp.eq.s32.totalorder %s42, 3
      %p229 = por %p227, %p228
      %p230 = scmp.ne.s32.totalorder %s221, %s222
      %p231 = scmp.eq.s32.totalorder %s42, 0
      %p232 = por %p230, %p231
      %p233 = scmp.ne.s32.totalorder %s221, %s222
      %p234 = scmp.eq.s32.totalorder %s43, 3
      %p235 = por %p233, %p234
      %p237 = scmp.ne.s32.totalorder %s222, %s236
      %p238 = scmp.eq.s32.totalorder %s43, 0
      %p239 = por %p237, %p238
      %s241 = sadd.s32 %s240, 1
      %p244 = scmp.eq.s32.totalorder %s37, 3
      %p245 = scmp.ne.s32.totalorder %s240, %s242
      %p246 = scmp.eq.s32.totalorder %s37, 0
      %p247 = por %p245, %p246
      %p248 = scmp.ne.s32.totalorder %s240, %s242
      %p249 = scmp.eq.s32.totalorder %s42, 3
      %p250 = por %p248, %p249
      %p251 = scmp.ne.s32.totalorder %s242, %s243
      %p252 = scmp.eq.s32.totalorder %s42, 0
      %p253 = por %p251, %p252
      %p254 = scmp.ne.s32.totalorder %s242, %s243
      %p255 = scmp.eq.s32.totalorder %s43, 3
      %p256 = por %p254, %p255
      %p258 = scmp.ne.s32.totalorder %s243, %s257
      %p259 = scmp.eq.s32.totalorder %s43, 0
      %p260 = por %p258, %p259
      %s262 = sadd.s32 %s261, 1
      %p265 = scmp.eq.s32.totalorder %s37, 3
      %p266 = scmp.ne.s32.totalorder %s261, %s263
      %p267 = scmp.eq.s32.totalorder %s37, 0
      %p268 = por %p266, %p267
      %p269 = scmp.ne.s32.totalorder %s261, %s263
      %p270 = scmp.eq.s32.totalorder %s42, 3
      %p271 = por %p269, %p270
      %p272 = scmp.ne.s32.totalorder %s263, %s264
      %p273 = scmp.eq.s32.totalorder %s42, 0
      %p274 = por %p272, %p273
      %p275 = scmp.ne.s32.totalorder %s263, %s264
      %p276 = scmp.eq.s32.totalorder %s43, 3
      %p277 = por %p275, %p276
      %p279 = scmp.ne.s32.totalorder %s264, %s278
      %p280 = scmp.eq.s32.totalorder %s43, 0
      %p281 = por %p279, %p280
      %s283 = sadd.s32 %s282, 1
      %p286 = scmp.eq.s32.totalorder %s37, 3
      %p287 = scmp.ne.s32.totalorder %s282, %s284
      %p288 = scmp.eq.s32.totalorder %s37, 0
      %p289 = por %p287, %p288
      %p290 = scmp.ne.s32.totalorder %s282, %s284
      %p291 = scmp.eq.s32.totalorder %s42, 3
      %p292 = por %p290, %p291
      %p293 = scmp.ne.s32.totalorder %s284, %s285
      %p294 = scmp.eq.s32.totalorder %s42, 0
      %p295 = por %p293, %p294
      %p296 = scmp.ne.s32.totalorder %s284, %s285
      %p297 = scmp.eq.s32.totalorder %s43, 3
      %p298 = por %p296, %p297
      %p300 = scmp.ne.s32.totalorder %s285, %s299
      %p301 = scmp.eq.s32.totalorder %s43, 0
      %p302 = por %p300, %p301
      %s304 = sadd.s32 %s303, 1
      %p307 = scmp.eq.s32.totalorder %s37, 3
      %p308 = scmp.ne.s32.totalorder %s303, %s305
      %p309 = scmp.eq.s32.totalorder %s37, 0
      %p310 = por %p308, %p309
      %p311 = scmp.ne.s32.totalorder %s303, %s305
      %p312 = scmp.eq.s32.totalorder %s42, 3
      %p313 = por %p311, %p312
      %p314 = scmp.ne.s32.totalorder %s305, %s306
      %p315 = scmp.eq.s32.totalorder %s42, 0
      %p316 = por %p314, %p315
      %p317 = scmp.ne.s32.totalorder %s305, %s306
      %p318 = scmp.eq.s32.totalorder %s43, 3
      %p319 = por %p317, %p318
      %p321 = scmp.ne.s32.totalorder %s306, %s320
      %p322 = scmp.eq.s32.totalorder %s43, 0
      %p323 = por %p321, %p322
      %s325 = sadd.s32 %s324, 1
      %p328 = scmp.eq.s32.totalorder %s37, 3
      %p329 = scmp.ne.s32.totalorder %s324, %s326
      %p330 = scmp.eq.s32.totalorder %s37, 0
      %p331 = por %p329, %p330
      %p332 = scmp.ne.s32.totalorder %s324, %s326
      %p333 = scmp.eq.s32.totalorder %s42, 3
      %p334 = por %p332, %p333
      %p335 = scmp.ne.s32.totalorder %s326, %s327
      %p336 = scmp.eq.s32.totalorder %s42, 0
      %p337 = por %p335, %p336
      %p338 = scmp.ne.s32.totalorder %s326, %s327
      %p339 = scmp.eq.s32.totalorder %s43, 3
      %p340 = por %p338, %p339
      %p342 = scmp.ne.s32.totalorder %s327, %s341
      %p343 = scmp.eq.s32.totalorder %s43, 0
      %p344 = por %p342, %p343
      %s346 = sadd.s32 %s345, 1
      %p349 = scmp.eq.s32.totalorder %s37, 3
      %p350 = scmp.ne.s32.totalorder %s345, %s347
      %p351 = scmp.eq.s32.totalorder %s37, 0
      %p352 = por %p350, %p351
      %p353 = scmp.ne.s32.totalorder %s345, %s347
      %p354 = scmp.eq.s32.totalorder %s42, 3
      %p355 = por %p353, %p354
      %p356 = scmp.ne.s32.totalorder %s347, %s348
      %p357 = scmp.eq.s32.totalorder %s42, 0
      %p358 = por %p356, %p357
      %p359 = scmp.ne.s32.totalorder %s347, %s348
      %p360 = scmp.eq.s32.totalorder %s43, 3
      %p361 = por %p359, %p360
      %p363 = scmp.ne.s32.totalorder %s348, %s362
      %p364 = scmp.eq.s32.totalorder %s43, 0
      %p365 = por %p363, %p364
      %s367 = sadd.s32 %s366, 1
      %p370 = scmp.eq.s32.totalorder %s37, 3
      %p371 = scmp.ne.s32.totalorder %s366, %s368
      %p372 = scmp.eq.s32.totalorder %s37, 0
      %p373 = por %p371, %p372
      %p374 = scmp.ne.s32.totalorder %s366, %s368
      %p375 = scmp.eq.s32.totalorder %s42, 3
      %p376 = por %p374, %p375
      %p377 = scmp.ne.s32.totalorder %s368, %s369
      %p378 = scmp.eq.s32.totalorder %s42, 0
      %p379 = por %p377, %p378
      %p380 = scmp.ne.s32.totalorder %s368, %s369
      %p381 = scmp.eq.s32.totalorder %s43, 3
      %p382 = por %p380, %p381
      %p384 = scmp.ne.s32.totalorder %s369, %s383
      %p385 = scmp.eq.s32.totalorder %s43, 0
      %p386 = por %p384, %p385
      %s388 = sadd.s32 %s387, 1
      %p391 = scmp.eq.s32.totalorder %s37, 3
      %p392 = scmp.ne.s32.totalorder %s387, %s389
      %p393 = scmp.eq.s32.totalorder %s37, 0
      %p394 = por %p392, %p393
      %p395 = scmp.ne.s32.totalorder %s387, %s389
      %p396 = scmp.eq.s32.totalorder %s42, 3
      %p397 = por %p395, %p396
      %p398 = scmp.ne.s32.totalorder %s389, %s390
      %p399 = scmp.eq.s32.totalorder %s42, 0
      %p400 = por %p398, %p399
      %p401 = scmp.ne.s32.totalorder %s389, %s390
      %p402 = scmp.eq.s32.totalorder %s43, 3
      %p403 = por %p401, %p402
      %p405 = scmp.ne.s32.totalorder %s390, %s404
      %p406 = scmp.eq.s32.totalorder %s43, 0
      %p407 = por %p405, %p406
      %s409 = sadd.s32 %s408, 1
      %p412 = scmp.eq.s32.totalorder %s37, 3
      %p413 = scmp.ne.s32.totalorder %s408, %s410
      %p414 = scmp.eq.s32.totalorder %s37, 0
      %p415 = por %p413, %p414
      %p416 = scmp.ne.s32.totalorder %s408, %s410
      %p417 = scmp.eq.s32.totalorder %s42, 3
      %p418 = por %p416, %p417
      %p419 = scmp.ne.s32.totalorder %s410, %s411
      %p420 = scmp.eq.s32.totalorder %s42, 0
      %p421 = por %p419, %p420
      %p422 = scmp.ne.s32.totalorder %s410, %s411
      %p423 = scmp.eq.s32.totalorder %s43, 3
      %p424 = por %p422, %p423
      %p426 = scmp.ne.s32.totalorder %s411, %s425
      %p427 = scmp.eq.s32.totalorder %s43, 0
      %p428 = por %p426, %p427
      %s430 = sadd.s32 %s429, 1
      %p433 = scmp.eq.s32.totalorder %s37, 3
      %p434 = scmp.ne.s32.totalorder %s429, %s431
      %p435 = scmp.eq.s32.totalorder %s37, 0
      %p436 = por %p434, %p435
      %p437 = scmp.ne.s32.totalorder %s429, %s431
      %p438 = scmp.eq.s32.totalorder %s42, 3
      %p439 = por %p437, %p438
      %p440 = scmp.ne.s32.totalorder %s431, %s432
      %p441 = scmp.eq.s32.totalorder %s42, 0
      %p442 = por %p440, %p441
      %p443 = scmp.ne.s32.totalorder %s431, %s432
      %p444 = scmp.eq.s32.totalorder %s43, 3
      %p445 = por %p443, %p444
      %p447 = scmp.ne.s32.totalorder %s432, %s446
      %p448 = scmp.eq.s32.totalorder %s43, 0
      %p449 = por %p447, %p448
      %s451 = sadd.s32 %s450, 1
      %p454 = scmp.eq.s32.totalorder %s37, 3
      %p455 = scmp.ne.s32.totalorder %s450, %s452
      %p456 = scmp.eq.s32.totalorder %s37, 0
      %p457 = por %p455, %p456
      %p458 = scmp.ne.s32.totalorder %s450, %s452
      %p459 = scmp.eq.s32.totalorder %s42, 3
      %p460 = por %p458, %p459
      %p461 = scmp.ne.s32.totalorder %s452, %s453
      %p462 = scmp.eq.s32.totalorder %s42, 0
      %p463 = por %p461, %p462
      %p464 = scmp.ne.s32.totalorder %s452, %s453
      %p465 = scmp.eq.s32.totalorder %s43, 3
      %p466 = por %p464, %p465
      %p468 = scmp.ne.s32.totalorder %s453, %s467
      %p469 = scmp.eq.s32.totalorder %s43, 0
      %p470 = por %p468, %p469
      %s472 = sadd.s32 %s471, 1
      %p475 = scmp.eq.s32.totalorder %s37, 3
      %p476 = scmp.ne.s32.totalorder %s471, %s473
      %p477 = scmp.eq.s32.totalorder %s37, 0
      %p478 = por %p476, %p477
      %p479 = scmp.ne.s32.totalorder %s471, %s473
      %p480 = scmp.eq.s32.totalorder %s42, 3
      %p481 = por %p479, %p480
      %p482 = scmp.ne.s32.totalorder %s473, %s474
      %p483 = scmp.eq.s32.totalorder %s42, 0
      %p484 = por %p482, %p483
      %p485 = scmp.ne.s32.totalorder %s473, %s474
      %p486 = scmp.eq.s32.totalorder %s43, 3
      %p487 = por %p485, %p486
      %p489 = scmp.ne.s32.totalorder %s474, %s488
      %p490 = scmp.eq.s32.totalorder %s43, 0
      %p491 = por %p489, %p490
      %s493 = sadd.s32 %s492, 1
      %p496 = scmp.eq.s32.totalorder %s37, 3
      %p497 = scmp.ne.s32.totalorder %s492, %s494
      %p498 = scmp.eq.s32.totalorder %s37, 0
      %p499 = por %p497, %p498
      %p500 = scmp.ne.s32.totalorder %s492, %s494
      %p501 = scmp.eq.s32.totalorder %s42, 3
      %p502 = por %p500, %p501
      %p503 = scmp.ne.s32.totalorder %s494, %s495
      %p504 = scmp.eq.s32.totalorder %s42, 0
      %p505 = por %p503, %p504
      %p506 = scmp.ne.s32.totalorder %s494, %s495
      %p507 = scmp.eq.s32.totalorder %s43, 3
      %p508 = por %p506, %p507
      %p510 = scmp.ne.s32.totalorder %s495, %s509
      %p511 = scmp.eq.s32.totalorder %s43, 0
      %p512 = por %p510, %p511
      %s513 = ssub.s32 %s44, %s56
      %s514 = ssub.s32 %s45, %s52
      %s515 = sor.u32 %s513, %s514
      %p516 = scmp.eq.s32.totalorder %s515, 0
      %s518 = sadd.s32 %s517, 1
      %s519 = scalar_select %p516, %s517, %s518
      %p522 = pneg %p516
      %p523 = scmp.eq.s32.totalorder %s37, 3
      %p524 = por %p522, %p523
      %p525 = scmp.ne.s32.totalorder %s517, %s520
      %p526 = scmp.eq.s32.totalorder %s37, 0
      %p527 = por %p525, %p526
      %p528 = scmp.ne.s32.totalorder %s517, %s520
      %p529 = scmp.eq.s32.totalorder %s42, 3
      %p530 = por %p528, %p529
      %p531 = scmp.ne.s32.totalorder %s520, %s521
      %p532 = scmp.eq.s32.totalorder %s42, 0
      %p533 = por %p531, %p532
      %p534 = scmp.ne.s32.totalorder %s520, %s521
      %p535 = scmp.eq.s32.totalorder %s43, 3
      %p536 = por %p534, %p535
      %p538 = scmp.ne.s32.totalorder %s521, %s537
      %p539 = scmp.eq.s32.totalorder %s43, 0
      %p540 = por %p538, %p539
      %p541 = scmp.le.s32.totalorder 1, %s37
      %p542 = scmp.lt.s32.totalorder %s37, 5
      %p543 = pnand %p541, %p542
      %p544 = pneg %p543
      // Predicated region
      $region9: #{tpu_custom_call.1} parent=5 // pred_check
        _
      $region10: #{tpu_custom_call.1} parent=5 // pred_check_branch
        %546 = sbr.rel (%p543) target = $region12
      $region11: #{tpu_custom_call.1} parent=5 // pred_region
        %s547 = ssub.s32 %s37, 1
        // Predicated region
        $region13: #{tpu_custom_call.1} parent=11 // pred_check
          %p548 = pneg %p148
        $region14: #{tpu_custom_call.1} parent=11 // pred_check_branch
          %550 = sbr.rel (%p548) target = $region16
        $region15: #{tpu_custom_call.1} parent=11 // pred_region
          _
        $region16: #{tpu_custom_call.1} parent=11 // pred_fallthru
          _
        // Predicated region
        $region17: #{tpu_custom_call.1} parent=11 // pred_check
          %p551 = pneg %p169
        $region18: #{tpu_custom_call.1} parent=11 // pred_check_branch
          %553 = sbr.rel (%p551) target = $region20
        $region19: #{tpu_custom_call.1} parent=11 // pred_region
          _
        $region20: #{tpu_custom_call.1} parent=11 // pred_fallthru
          _
        // Predicated region
        $region21: #{tpu_custom_call.1} parent=11 // pred_check
          %p554 = pneg %p190
        $region22: #{tpu_custom_call.1} parent=11 // pred_check_branch
          %556 = sbr.rel (%p554) target = $region24
        $region23: #{tpu_custom_call.1} parent=11 // pred_region
          %s558 = ssub.s32 256, 256
          %559 = vsyncadd [#allocation9], %s558
          %s560 = sshll.u32 [#allocation8], 4
          %s561 = int_to_ptr.vmem [resolvable:$true] %s560
          %566 = dma.hbm_to_vmem [thread:$0]  %s5, 256, %s561, [#allocation9], 64, 64, 4
        $region24: #{tpu_custom_call.1} parent=11 // pred_fallthru
          _
        // Predicated region
        $region25: #{tpu_custom_call.1} parent=11 // pred_check
          %p567 = pneg %p211
        $region26: #{tpu_custom_call.1} parent=11 // pred_check_branch
          %569 = sbr.rel (%p567) target = $region28
        $region27: #{tpu_custom_call.1} parent=11 // pred_region
          %s571 = ssub.s32 16, 16
          %572 = vsyncadd [#allocation9], %s571
          %s574 = sshll.u32 [#allocation10], 4
          %s575 = int_to_ptr.vmem [resolvable:$true] %s574
          %577 = dma.hbm_to_vmem [thread:$0]  %s6, 16, %s575, [#allocation9]
        $region28: #{tpu_custom_call.1} parent=11 // pred_fallthru
          _
        // Predicated region
        $region29: #{tpu_custom_call.1} parent=11 // pred_check
          %p578 = pneg %p232
        $region30: #{tpu_custom_call.1} parent=11 // pred_check_branch
          %580 = sbr.rel (%p578) target = $region32
        $region31: #{tpu_custom_call.1} parent=11 // pred_region
          %s582 = ssub.s32 256, 256
          %583 = vsyncadd [#allocation12], %s582
          %s584 = sshll.u32 [#allocation11], 4
          %s585 = int_to_ptr.vmem [resolvable:$true] %s584
          %590 = dma.hbm_to_vmem [thread:$0]  %s7, 256, %s585, [#allocation12], 64, 64, 4
        $region32: #{tpu_custom_call.1} parent=11 // pred_fallthru
          _
        // Predicated region
        $region33: #{tpu_custom_call.1} parent=11 // pred_check
          %p591 = pneg %p253
        $region34: #{tpu_custom_call.1} parent=11 // pred_check_branch
          %593 = sbr.rel (%p591) target = $region36
        $region35: #{tpu_custom_call.1} parent=11 // pred_region
          %s595 = ssub.s32 16, 16
          %596 = vsyncadd [#allocation12], %s595
          %s598 = sshll.u32 [#allocation13], 4
          %s599 = int_to_ptr.vmem [resolvable:$true] %s598
          %601 = dma.hbm_to_vmem [thread:$0]  %s8, 16, %s599, [#allocation12]
        $region36: #{tpu_custom_call.1} parent=11 // pred_fallthru
          _
        // Predicated region
        $region37: #{tpu_custom_call.1} parent=11 // pred_check
          %p602 = pneg %p274
        $region38: #{tpu_custom_call.1} parent=11 // pred_check_branch
          %604 = sbr.rel (%p602) target = $region40
        $region39: #{tpu_custom_call.1} parent=11 // pred_region
          _
        $region40: #{tpu_custom_call.1} parent=11 // pred_fallthru
          _
        // Predicated region
        $region41: #{tpu_custom_call.1} parent=11 // pred_check
          %p605 = pneg %p295
        $region42: #{tpu_custom_call.1} parent=11 // pred_check_branch
          %607 = sbr.rel (%p605) target = $region44
        $region43: #{tpu_custom_call.1} parent=11 // pred_region
          %s609 = ssub.s32 16, 16
          %610 = vsyncadd [#allocation15], %s609
          %s612 = sshll.u32 [#allocation14], 4
          %s613 = int_to_ptr.vmem [resolvable:$true] %s612
          %615 = dma.hbm_to_vmem [thread:$0]  %s10, 16, %s613, [#allocation15]
        $region44: #{tpu_custom_call.1} parent=11 // pred_fallthru
          _
        // Predicated region
        $region45: #{tpu_custom_call.1} parent=11 // pred_check
          %p616 = pneg %p316
        $region46: #{tpu_custom_call.1} parent=11 // pred_check_branch
          %618 = sbr.rel (%p616) target = $region48
        $region47: #{tpu_custom_call.1} parent=11 // pred_region
          %s620 = ssub.s32 16, 16
          %621 = vsyncadd [#allocation15], %s620
          %s623 = sshll.u32 [#allocation16], 4
          %s624 = int_to_ptr.vmem [resolvable:$true] %s623
          %626 = dma.hbm_to_vmem [thread:$0]  %s11, 16, %s624, [#allocation15]
        $region48: #{tpu_custom_call.1} parent=11 // pred_fallthru
          _
        // Predicated region
        $region49: #{tpu_custom_call.1} parent=11 // pred_check
          %p627 = pneg %p337
        $region50: #{tpu_custom_call.1} parent=11 // pred_check_branch
          %629 = sbr.rel (%p627) target = $region52
        $region51: #{tpu_custom_call.1} parent=11 // pred_region
          %s631 = ssub.s32 16, 16
          %632 = vsyncadd [#allocation18], %s631
          %s634 = sshll.u32 [#allocation17], 4
          %s635 = int_to_ptr.vmem [resolvable:$true] %s634
          %637 = dma.hbm_to_vmem [thread:$0]  %s12, 16, %s635, [#allocation18]
        $region52: #{tpu_custom_call.1} parent=11 // pred_fallthru
          _
        // Predicated region
        $region53: #{tpu_custom_call.1} parent=11 // pred_check
          %p638 = pneg %p358
        $region54: #{tpu_custom_call.1} parent=11 // pred_check_branch
          %640 = sbr.rel (%p638) target = $region56
        $region55: #{tpu_custom_call.1} parent=11 // pred_region
          _
        $region56: #{tpu_custom_call.1} parent=11 // pred_fallthru
          _
        // Predicated region
        $region57: #{tpu_custom_call.1} parent=11 // pred_check
          %p641 = pneg %p379
        $region58: #{tpu_custom_call.1} parent=11 // pred_check_branch
          %643 = sbr.rel (%p641) target = $region60
        $region59: #{tpu_custom_call.1} parent=11 // pred_region
          _
        $region60: #{tpu_custom_call.1} parent=11 // pred_fallthru
          _
        // Predicated region
        $region61: #{tpu_custom_call.1} parent=11 // pred_check
          %p644 = pneg %p400
        $region62: #{tpu_custom_call.1} parent=11 // pred_check_branch
          %646 = sbr.rel (%p644) target = $region64
        $region63: #{tpu_custom_call.1} parent=11 // pred_region
          _
        $region64: #{tpu_custom_call.1} parent=11 // pred_fallthru
          _
        // Predicated region
        $region65: #{tpu_custom_call.1} parent=11 // pred_check
          %p647 = pneg %p421
        $region66: #{tpu_custom_call.1} parent=11 // pred_check_branch
          %649 = sbr.rel (%p647) target = $region68
        $region67: #{tpu_custom_call.1} parent=11 // pred_region
          _
        $region68: #{tpu_custom_call.1} parent=11 // pred_fallthru
          _
        // Predicated region
        $region69: #{tpu_custom_call.1} parent=11 // pred_check
          %p650 = pneg %p442
        $region70: #{tpu_custom_call.1} parent=11 // pred_check_branch
          %652 = sbr.rel (%p650) target = $region72
        $region71: #{tpu_custom_call.1} parent=11 // pred_region
          _
        $region72: #{tpu_custom_call.1} parent=11 // pred_fallthru
          _
        // Predicated region
        $region73: #{tpu_custom_call.1} parent=11 // pred_check
          %p653 = pneg %p463
        $region74: #{tpu_custom_call.1} parent=11 // pred_check_branch
          %655 = sbr.rel (%p653) target = $region76
        $region75: #{tpu_custom_call.1} parent=11 // pred_region
          _
        $region76: #{tpu_custom_call.1} parent=11 // pred_fallthru
          _
        // Predicated region
        $region77: #{tpu_custom_call.1} parent=11 // pred_check
          %p656 = pneg %p484
        $region78: #{tpu_custom_call.1} parent=11 // pred_check_branch
          %658 = sbr.rel (%p656) target = $region80
        $region79: #{tpu_custom_call.1} parent=11 // pred_region
          _
        $region80: #{tpu_custom_call.1} parent=11 // pred_fallthru
          _
        // Predicated region
        $region81: #{tpu_custom_call.1} parent=11 // pred_check
          %p659 = pneg %p505
        $region82: #{tpu_custom_call.1} parent=11 // pred_check_branch
          %661 = sbr.rel (%p659) target = $region84
        $region83: #{tpu_custom_call.1} parent=11 // pred_region
          _
        $region84: #{tpu_custom_call.1} parent=11 // pred_fallthru
          _
      $region12: #{tpu_custom_call.1} parent=5 // pred_fallthru
        _
      %p662 = scmp.lt.s32.totalorder %s37, 4
      // Predicated region
      $region85: #{tpu_custom_call.1} parent=5 // pred_check
        %p663 = pneg %p662
      $region86: #{tpu_custom_call.1} parent=5 // pred_check_branch
        %665 = sbr.rel (%p663) target = $region88
      $region87: #{tpu_custom_call.1} parent=5 // pred_region
        // Predicated region
        $region89: #{tpu_custom_call.1} parent=87 // pred_check
          %p666 = pneg %p69
        $region90: #{tpu_custom_call.1} parent=87 // pred_check_branch
          %668 = sbr.rel (%p666) target = $region92
        $region91: #{tpu_custom_call.1} parent=87 // pred_region
          %p669 = scmp.lt.s32.totalorder %s44, 1
          %s670 = scalar_select %p669, %s44, 1
          %s671 = smul.addr %s670, 2
          %s672 = smul.addr %s671, 4
          %s673 = scalar_lea.vmem %s0, %s672
        $region92: #{tpu_custom_call.1} parent=87 // pred_fallthru
          _
        // Predicated region
        $region93: #{tpu_custom_call.1} parent=87 // pred_check
          %p674 = pneg %p95
        $region94: #{tpu_custom_call.1} parent=87 // pred_check_branch
          %676 = sbr.rel (%p674) target = $region96
        $region95: #{tpu_custom_call.1} parent=87 // pred_region
          %p677 = scmp.lt.s32.totalorder %s44, 1
          %s678 = scalar_select %p677, %s44, 1
          %s679 = smul.addr %s678, 2
          %s680 = smul.addr %s679, 4
          %s681 = scalar_lea.vmem %s1, %s680
        $region96: #{tpu_custom_call.1} parent=87 // pred_fallthru
          _
        // Predicated region
        $region97: #{tpu_custom_call.1} parent=87 // pred_check
          %p682 = pneg %p121
        $region98: #{tpu_custom_call.1} parent=87 // pred_check_branch
          %684 = sbr.rel (%p682) target = $region100
        $region99: #{tpu_custom_call.1} parent=87 // pred_region
          %s685 = sand.u32 %s111, 1
          %s686 = scalar_lea.sflag [#allocation6], %s685
          %s687 = sand.u32 %s111, 1
          %s688 = scalar_lea.vmem [#allocation5], %s687
          %s690 = ssub.s32 16, 16
          %691 = vsyncadd %s686, %s690
          %s692 = smul.addr %s44, 16
          %s693 = scalar_lea.hbm %s2, %s692
          %s695 = sshll.u32 %s688, 4
          %s696 = int_to_ptr.vmem [resolvable:$true] %s695
          %698 = dma.hbm_to_vmem [thread:$0]  %s693, 16, %s696, %s686
        $region100: #{tpu_custom_call.1} parent=87 // pred_fallthru
          _
      $region88: #{tpu_custom_call.1} parent=5 // pred_fallthru
        _
      %p699 = scmp.le.s32.totalorder 1, %s37
      %p700 = scmp.lt.s32.totalorder %s37, 5
      %p701 = pnand %p699, %p700
      %p702 = pneg %p701
      // Predicated region
      $region101: #{tpu_custom_call.1} parent=5 // pred_check
        _
      $region102: #{tpu_custom_call.1} parent=5 // pred_check_branch
        %704 = sbr.rel (%p701) target = $region104
      $region103: #{tpu_custom_call.1} parent=5 // pred_region
        %s705 = ssub.s32 %s37, 1
        %s706 = sand.u32 %s114, 1
        %s707 = scalar_lea.sflag [#allocation6], %s706
        %s708 = sand.u32 %s114, 1
        %s709 = scalar_lea.vmem [#allocation5], %s708
        // Predicated region
        $region105: #{tpu_custom_call.1} parent=103 // pred_check
          %p710 = pneg %p127
        $region106: #{tpu_custom_call.1} parent=103 // pred_check_branch
          %712 = sbr.rel (%p710) target = $region108
        $region107: #{tpu_custom_call.1} parent=103 // pred_region
          %713 = dma.done %s707, 16
        $region108: #{tpu_custom_call.1} parent=103 // pred_fallthru
          _
        // Predicated region
        $region109: #{tpu_custom_call.1} parent=103 // pred_check
          %p714 = pneg %p190
        $region110: #{tpu_custom_call.1} parent=103 // pred_check_branch
          %716 = sbr.rel (%p714) target = $region112
        $region111: #{tpu_custom_call.1} parent=103 // pred_region
          %717 = dma.done [#allocation9], 256
        $region112: #{tpu_custom_call.1} parent=103 // pred_fallthru
          _
        // Predicated region
        $region113: #{tpu_custom_call.1} parent=103 // pred_check
          %p718 = pneg %p211
        $region114: #{tpu_custom_call.1} parent=103 // pred_check_branch
          %720 = sbr.rel (%p718) target = $region116
        $region115: #{tpu_custom_call.1} parent=103 // pred_region
          %721 = dma.done [#allocation9], 16
        $region116: #{tpu_custom_call.1} parent=103 // pred_fallthru
          _
        // Predicated region
        $region117: #{tpu_custom_call.1} parent=103 // pred_check
          %p722 = pneg %p232
        $region118: #{tpu_custom_call.1} parent=103 // pred_check_branch
          %724 = sbr.rel (%p722) target = $region120
        $region119: #{tpu_custom_call.1} parent=103 // pred_region
          %725 = dma.done [#allocation12], 256
        $region120: #{tpu_custom_call.1} parent=103 // pred_fallthru
          _
        // Predicated region
        $region121: #{tpu_custom_call.1} parent=103 // pred_check
          %p726 = pneg %p253
        $region122: #{tpu_custom_call.1} parent=103 // pred_check_branch
          %728 = sbr.rel (%p726) target = $region124
        $region123: #{tpu_custom_call.1} parent=103 // pred_region
          %729 = dma.done [#allocation12], 16
        $region124: #{tpu_custom_call.1} parent=103 // pred_fallthru
          _
        // Predicated region
        $region125: #{tpu_custom_call.1} parent=103 // pred_check
          %p730 = pneg %p295
        $region126: #{tpu_custom_call.1} parent=103 // pred_check_branch
          %732 = sbr.rel (%p730) target = $region128
        $region127: #{tpu_custom_call.1} parent=103 // pred_region
          %733 = dma.done [#allocation15], 16
        $region128: #{tpu_custom_call.1} parent=103 // pred_fallthru
          _
        // Predicated region
        $region129: #{tpu_custom_call.1} parent=103 // pred_check
          %p734 = pneg %p316
        $region130: #{tpu_custom_call.1} parent=103 // pred_check_branch
          %736 = sbr.rel (%p734) target = $region132
        $region131: #{tpu_custom_call.1} parent=103 // pred_region
          %737 = dma.done [#allocation15], 16
        $region132: #{tpu_custom_call.1} parent=103 // pred_fallthru
          _
        // Predicated region
        $region133: #{tpu_custom_call.1} parent=103 // pred_check
          %p738 = pneg %p337
        $region134: #{tpu_custom_call.1} parent=103 // pred_check_branch
          %740 = sbr.rel (%p738) target = $region136
        $region135: #{tpu_custom_call.1} parent=103 // pred_region
          %741 = dma.done [#allocation18], 16
        $region136: #{tpu_custom_call.1} parent=103 // pred_fallthru
          _
        %p742 = scmp.lt.s32.totalorder %s46, 1
        %s743 = scalar_select %p742, %s46, 1
        %s744 = smul.addr %s743, 2
        %s745 = smul.addr %s744, 4
        %s746 = scalar_lea.vmem %s0, %s745
        %p747 = pneg %p75
        %p748 = pneg %p72
        %p749 = scmp.lt.s32.totalorder %s46, 1
        %s750 = scalar_select %p749, %s46, 1
        %s751 = smul.addr %s750, 2
        %s752 = smul.addr %s751, 4
        %s753 = scalar_lea.vmem %s1, %s752
        %p754 = pneg %p101
        %p755 = pneg %p98
        %s756 = sand.u32 %s114, 1
        %s757 = scalar_lea.sflag [#allocation6], %s756
        %s758 = sand.u32 %s114, 1
        %s759 = scalar_lea.vmem [#allocation5], %s758
        %p760 = pneg %p127
        %p761 = pneg %p124
        %p762 = pneg %p148
        %p763 = pneg %p145
        %p764 = pneg %p169
        %p765 = pneg %p166
        %p766 = pneg %p190
        %p767 = pneg %p187
        %p768 = pneg %p211
        %p769 = pneg %p208
        %p770 = pneg %p232
        %p771 = pneg %p229
        %p772 = pneg %p253
        %p773 = pneg %p250
        %p774 = pneg %p274
        %p775 = pneg %p271
        %p776 = pneg %p295
        %p777 = pneg %p292
        %p778 = pneg %p316
        %p779 = pneg %p313
        %p780 = pneg %p337
        %p781 = pneg %p334
        %p782 = pneg %p358
        %p783 = pneg %p355
        %p784 = pneg %p379
        %p785 = pneg %p376
        %p786 = pneg %p400
        %p787 = pneg %p397
        %p788 = pneg %p421
        %p789 = pneg %p418
        %p790 = pneg %p442
        %p791 = pneg %p439
        %p792 = pneg %p463
        %p793 = pneg %p460
        %p794 = pneg %p484
        %p795 = pneg %p481
        %p796 = pneg %p505
        %p797 = pneg %p502
        %p798 = pneg %p533
        %p799 = pneg %p530
        %s800 = sand.u32 %s520, 1
        %s801 = scalar_lea.sflag [#allocation7], %s800
        %s802 = sand.u32 %s520, 1
        %s803 = smul.addr %s802, 4
        %s804 = scalar_lea.vmem [#allocation19], %s803
        %p805 = scmp.lt.s32.totalorder %s46, 1
        %s806 = scalar_select %p805, %s46, 1
        %s807 = smul.addr %s806, 2
        %s808 = smul.addr %s807, 4
        %s809 = scalar_lea.vmem %s0, %s808
        %p810 = scmp.lt.s32.totalorder %s46, 1
        %s811 = scalar_select %p810, %s46, 1
        %s812 = smul.addr %s811, 2
        %s813 = smul.addr %s812, 4
        %s814 = scalar_lea.vmem %s1, %s813
        %p816 = scmp.eq.s32.totalorder %s47, 0
        // Predicated region
        $region137: #{tpu_custom_call.1} parent=103 // pred_check
          %p817 = pneg %p816
        $region138: #{tpu_custom_call.1} parent=103 // pred_check_branch
          %819 = sbr.rel (%p817) target = $region140
        $region139: #{tpu_custom_call.1} parent=103 // pred_region
          %v820 = vld [vmem:[%s809] sm:$0xf]
          %v821 = vld [vmem:[%s809 + $0x4] sm:$0xf]
          %v822 = vld [vmem:[%s814] sm:$0xf]
          %v823 = vld [vmem:[%s814 + $0x4] sm:$0xf]
          %v824 = vadd.bf16 %v820, %v822
          %v825 = vadd.bf16 %v821, %v823
          %v826 = vld [vmem:[#allocation8] sm:$0xf]
          %v827 = vld [vmem:[#allocation8 + $0x4] sm:$0xf]
          %v828 = vld [vmem:[#allocation8 + $0x8] sm:$0xf]
          %v829 = vld [vmem:[#allocation8 + $0xc] sm:$0xf]
          %v830 = vld [vmem:[#allocation10] sm:$0x1]
          %v832 = vlaneseq
          %v833 = vshrl.u32 %v832, 7
          %v834 = vsub.s32 0, %v833
          %v835 = vrot.slane %v830, %v834
          %v839 = vunpack.c.l.b16 %v824
          %v840 = vunpack.c.l.b16 %v825
          %v841 = vpack.c.b16 %v840, %v839
          %v846 = vunpack.c.l.b16 %v826
          %v847 = vunpack.c.l.b16 %v827
          %v848 = vunpack.c.l.b16 %v828
          %v849 = vunpack.c.l.b16 %v829
          %v850 = vpack.c.b16 %v847, %v846
          %v851 = vpack.c.b16 %v849, %v848
          %vm854 = vcmask 261120
          %v856 = vsel %vm854, %v841, 0
          %858 = vmatprep.subr.bf16.mxu0 0
          %859 = vmatpush1.bf16.msra.mxu0 %v850
          %860 = vmatprep.subr.bf16.mxu0 0
          %861 = vmatpush1.bf16.msra.mxu0 %v851
          %862 = vmatprep.subr.bf16.mxu0 0
          %863 = vmatpush1.bf16.msra.mxu0 0
          %864 = vmatprep.subr.bf16.mxu0 0
          %865 = vmatpush1.bf16.msra.mxu0 0
          %866 = vmatprep.subr.bf16.mxu0 0
          %867 = vmatpush1.bf16.msra.mxu0 0
          %868 = vmatprep.subr.bf16.mxu0 0
          %869 = vmatpush1.bf16.msra.mxu0 0
          %870 = vmatprep.subr.bf16.mxu0 0
          %871 = vmatpush1.bf16.msra.mxu0 0
          %872 = vmatprep.subr.bf16.mxu0 0
          %873 = vmatpush1.bf16.msra.mxu0 0
          %874 = vmatprep.subr.bf16.mxu0 0
          %875 = vmatpush1.bf16.msra.mxu0 0
          %876 = vmatprep.subr.bf16.mxu0 0
          %877 = vmatpush1.bf16.msra.mxu0 0
          %878 = vmatprep.subr.bf16.mxu0 0
          %879 = vmatpush1.bf16.msra.mxu0 0
          %880 = vmatprep.subr.bf16.mxu0 0
          %881 = vmatpush1.bf16.msra.mxu0 0
          %882 = vmatprep.subr.bf16.mxu0 0
          %883 = vmatpush1.bf16.msra.mxu0 0
          %884 = vmatprep.subr.bf16.mxu0 0
          %885 = vmatpush1.bf16.msra.mxu0 0
          %886 = vmatprep.subr.bf16.mxu0 0
          %887 = vmatpush1.bf16.msra.mxu0 0
          %888 = vmatprep.subr.bf16.mxu0 0
          %889 = vmatpush1.bf16.msra.mxu0 0
          %890 = vmatprep.mubr.bf16.mxu0 0
          %891 = vmatmul.mubr.bf16.gmra.mrb[0].mxu0 %v856
          %v892 = vpop.f32.mrb[0].mxu0
          %v893 = vadd.f32 %v835, %v892
          %v894 = vpop.f32.mrb[0].mxu0
          %v895 = vpop.f32.mrb[0].mxu0
          %v896 = vadd.f32 %v835, %v895
          %v897 = vpop.f32.mrb[0].mxu0
          %898 = vdwg.mxu0
          %v899 = vpack.c.bf16 %v896, %v893
          %900 = vst.msk [vmem:[#allocation2] sm:$0xff] %vm854, %v899
          %v901 = vld [vmem:[#allocation11] sm:$0xf]
          %v902 = vld [vmem:[#allocation11 + $0x4] sm:$0xf]
          %v903 = vld [vmem:[#allocation11 + $0x8] sm:$0xf]
          %v904 = vld [vmem:[#allocation11 + $0xc] sm:$0xf]
          %v905 = vld [vmem:[#allocation13] sm:$0x1]
          %v907 = vlaneseq
          %v908 = vshrl.u32 %v907, 7
          %v909 = vsub.s32 0, %v908
          %v910 = vrot.slane %v905, %v909
          %v914 = vunpack.c.l.b16 %v820
          %v915 = vunpack.c.l.b16 %v821
          %v916 = vpack.c.b16 %v915, %v914
          %v921 = vunpack.c.l.b16 %v901
          %v922 = vunpack.c.l.b16 %v902
          %v923 = vunpack.c.l.b16 %v903
          %v924 = vunpack.c.l.b16 %v904
          %v925 = vpack.c.b16 %v922, %v921
          %v926 = vpack.c.b16 %v924, %v923
          %v930 = vsel %vm854, %v916, 0
          %932 = vmatprep.subr.bf16.mxu0 0
          %933 = vmatpush1.bf16.msra.mxu0 %v925
          %934 = vmatprep.subr.bf16.mxu0 0
          %935 = vmatpush1.bf16.msra.mxu0 %v926
          %936 = vmatprep.subr.bf16.mxu0 0
          %937 = vmatpush1.bf16.msra.mxu0 0
          %938 = vmatprep.subr.bf16.mxu0 0
          %939 = vmatpush1.bf16.msra.mxu0 0
          %940 = vmatprep.subr.bf16.mxu0 0
          %941 = vmatpush1.bf16.msra.mxu0 0
          %942 = vmatprep.subr.bf16.mxu0 0
          %943 = vmatpush1.bf16.msra.mxu0 0
          %944 = vmatprep.subr.bf16.mxu0 0
          %945 = vmatpush1.bf16.msra.mxu0 0
          %946 = vmatprep.subr.bf16.mxu0 0
          %947 = vmatpush1.bf16.msra.mxu0 0
          %948 = vmatprep.subr.bf16.mxu0 0
          %949 = vmatpush1.bf16.msra.mxu0 0
          %950 = vmatprep.subr.bf16.mxu0 0
          %951 = vmatpush1.bf16.msra.mxu0 0
          %952 = vmatprep.subr.bf16.mxu0 0
          %953 = vmatpush1.bf16.msra.mxu0 0
          %954 = vmatprep.subr.bf16.mxu0 0
          %955 = vmatpush1.bf16.msra.mxu0 0
          %956 = vmatprep.subr.bf16.mxu0 0
          %957 = vmatpush1.bf16.msra.mxu0 0
          %958 = vmatprep.subr.bf16.mxu0 0
          %959 = vmatpush1.bf16.msra.mxu0 0
          %960 = vmatprep.subr.bf16.mxu0 0
          %961 = vmatpush1.bf16.msra.mxu0 0
          %962 = vmatprep.subr.bf16.mxu0 0
          %963 = vmatpush1.bf16.msra.mxu0 0
          %964 = vmatprep.mubr.bf16.mxu0 0
          %965 = vmatmul.mubr.bf16.gmra.mrb[0].mxu0 %v930
          %v966 = vpop.f32.mrb[0].mxu0
          %v967 = vadd.f32 %v910, %v966
          %v968 = vpop.f32.mrb[0].mxu0
          %v969 = vpop.f32.mrb[0].mxu0
          %v970 = vadd.f32 %v910, %v969
          %v971 = vpop.f32.mrb[0].mxu0
          %972 = vdwg.mxu0
          %v973 = vpack.c.bf16 %v970, %v967
          %974 = vst.msk [vmem:[#allocation3] sm:$0xff] %vm854, %v973
        $region140: #{tpu_custom_call.1} parent=103 // pred_fallthru
          _
        %s975 = smul.u32 %s47, 8
        %s976 = sshra.s32 %s975, 3
        %s977 = sand.u32 %s975, 7
        %s978 = smul.addr %s976, 4
        %s979 = scalar_lea.vmem %s809, %s978
        %v980 = vld [vmem:[%s979] sm:$0xf]
        %s981 = smul.addr %s976, 4
        %s982 = scalar_lea.vmem %s814, %s981
        %v983 = vld [vmem:[%s982] sm:$0xf]
        %v984 = vadd.bf16 %v980, %v983
        %v985 = vld [vmem:[%s3] sm:$0xf]
        %v986 = vld [vmem:[%s3 + $0x4] sm:$0xf]
        %v987 = vld [vmem:[%s3 + $0x8] sm:$0xf]
        %v988 = vld [vmem:[%s3 + $0xc] sm:$0xf]
        %v989 = vld [vmem:[%s4] sm:$0x1]
        %v991 = vlaneseq
        %v992 = vshrl.u32 %v991, 7
        %v993 = vsub.s32 0, %v992
        %v994 = vrot.slane %v989, %v993
        %v1000 = vunpack.c.l.b16 %v985
        %v1001 = vunpack.c.l.b16 %v986
        %v1002 = vunpack.c.l.b16 %v987
        %v1003 = vunpack.c.l.b16 %v988
        %v1004 = vpack.c.b16 %v1001, %v1000
        %v1005 = vpack.c.b16 %v1003, %v1002
        %vm1008 = vcmask 261120
        %v1010 = vsel %vm1008, %v984, 0
        %1012 = vmatprep.subr.bf16.mxu0 0
        %1013 = vmatpush1.bf16.msra.mxu0 %v1004
        %1014 = vmatprep.subr.bf16.mxu0 0
        %1015 = vmatpush1.bf16.msra.mxu0 %v1005
        %1016 = vmatprep.subr.bf16.mxu0 0
        %1017 = vmatpush1.bf16.msra.mxu0 0
        %1018 = vmatprep.subr.bf16.mxu0 0
        %1019 = vmatpush1.bf16.msra.mxu0 0
        %1020 = vmatprep.subr.bf16.mxu0 0
        %1021 = vmatpush1.bf16.msra.mxu0 0
        %1022 = vmatprep.subr.bf16.mxu0 0
        %1023 = vmatpush1.bf16.msra.mxu0 0
        %1024 = vmatprep.subr.bf16.mxu0 0
        %1025 = vmatpush1.bf16.msra.mxu0 0
        %1026 = vmatprep.subr.bf16.mxu0 0
        %1027 = vmatpush1.bf16.msra.mxu0 0
        %1028 = vmatprep.subr.bf16.mxu0 0
        %1029 = vmatpush1.bf16.msra.mxu0 0
        %1030 = vmatprep.subr.bf16.mxu0 0
        %1031 = vmatpush1.bf16.msra.mxu0 0
        %1032 = vmatprep.subr.bf16.mxu0 0
        %1033 = vmatpush1.bf16.msra.mxu0 0
        %1034 = vmatprep.subr.bf16.mxu0 0
        %1035 = vmatpush1.bf16.msra.mxu0 0
        %1036 = vmatprep.subr.bf16.mxu0 0
        %1037 = vmatpush1.bf16.msra.mxu0 0
        %1038 = vmatprep.subr.bf16.mxu0 0
        %1039 = vmatpush1.bf16.msra.mxu0 0
        %1040 = vmatprep.subr.bf16.mxu0 0
        %1041 = vmatpush1.bf16.msra.mxu0 0
        %1042 = vmatprep.subr.bf16.mxu0 0
        %1043 = vmatpush1.bf16.msra.mxu0 0
        %1044 = vmatprep.mubr.bf16.mxu0 0
        %1045 = vmatmul.mubr.bf16.gmra.mrb[0].mxu0 %v1010
        %v1046 = vpop.f32.mrb[0].mxu0
        %v1047 = vadd.f32 %v994, %v1046
        %v1048 = vpop.f32.mrb[0].mxu0
        %v1049 = vpop.f32.mrb[0].mxu0
        %v1050 = vpop.f32.mrb[0].mxu0
        %1051 = vdwg.mxu0
        %v1052 = vmul.f32 %v1047, 0.35355338
        %v1053 = vpack.c.bf16 %v1052, %v1052
        %v1054 = vld [vmem:[%s709] sm:$0x1]
        %v1055 = vmul.f32 %v1054, -1e+09
        %v1056 = vld [vmem:[#allocation2] sm:$0xff]
        %v1057 = vld [vmem:[#allocation3] sm:$0xff]
        %v1059 = vlaneseq
        %v1060 = vshrl.u32 %v1059, 7
        %v1061 = vsub.s32 0, %v1060
        %v1062 = vrot.slane %v1055, %v1061
        %vm1064 = vcmask 64512
        %v1066 = vsel %vm1064, %v1053, 0
        %v1069 = vsel %vm1064, %v1056, 0
        %1071 = vmatprep.subr.bf16.mxu0 0
        %1072 = vmatpush1.bf16.xpose.msra.mxu0 %v1069
        %1073 = vmatprep.subr.bf16.mxu0 0
        %1074 = vmatpush1.bf16.xpose.msra.mxu0 0
        %1075 = vmatprep.subr.bf16.mxu0 0
        %1076 = vmatpush1.bf16.xpose.msra.mxu0 0
        %1077 = vmatprep.subr.bf16.mxu0 0
        %1078 = vmatpush1.bf16.xpose.msra.mxu0 0
        %1079 = vmatprep.subr.bf16.mxu0 0
        %1080 = vmatpush1.bf16.xpose.msra.mxu0 0
        %1081 = vmatprep.subr.bf16.mxu0 0
        %1082 = vmatpush1.bf16.xpose.msra.mxu0 0
        %1083 = vmatprep.subr.bf16.mxu0 0
        %1084 = vmatpush1.bf16.xpose.msra.mxu0 0
        %1085 = vmatprep.subr.bf16.mxu0 0
        %1086 = vmatpush1.bf16.xpose.msra.mxu0 0
        %1087 = vmatprep.subr.bf16.mxu0 0
        %1088 = vmatpush1.bf16.xpose.msra.mxu0 0
        %1089 = vmatprep.subr.bf16.mxu0 0
        %1090 = vmatpush1.bf16.xpose.msra.mxu0 0
        %1091 = vmatprep.subr.bf16.mxu0 0
        %1092 = vmatpush1.bf16.xpose.msra.mxu0 0
        %1093 = vmatprep.subr.bf16.mxu0 0
        %1094 = vmatpush1.bf16.xpose.msra.mxu0 0
        %1095 = vmatprep.subr.bf16.mxu0 0
        %1096 = vmatpush1.bf16.xpose.msra.mxu0 0
        %1097 = vmatprep.subr.bf16.mxu0 0
        %1098 = vmatpush1.bf16.xpose.msra.mxu0 0
        %1099 = vmatprep.subr.bf16.mxu0 0
        %1100 = vmatpush1.bf16.xpose.msra.mxu0 0
        %1101 = vmatprep.subr.bf16.mxu0 0
        %1102 = vmatpush1.bf16.xpose.msra.mxu0 0
        %1103 = vmatprep.mubr.bf16.mxu0 0
        %1104 = vmatmul.mubr.bf16.gmra.mrb[0].mxu0 %v1066
        %v1105 = vpop.f32.mrb[0].mxu0
        %v1106 = vadd.f32 %v1062, %v1105
        %v1107 = vpop.f32.mrb[0].mxu0
        %v1108 = vpop.f32.mrb[0].mxu0
        %v1109 = vpop.f32.mrb[0].mxu0
        %1110 = vdwg.mxu0
        %vm1111 = vcmask 130048
        %v1112 = vsel %vm1111, %v1106, -inf
        %1113 = vmax.xlane.f32.xlu0 %v1112
        %v1114 = vpop.xlane.xlu0 %1113
        %v1115 = vsub.f32 %v1106, %v1114
        %v1116 = vmul.f32 %v1115, 1.442695
        %v1117 = vpow.pop %v1116
        %v1118 = vsel %vm1111, %v1117, 0.0
        %1119 = vadd.xlane.f32.xlu0 %v1118
        %v1120 = vpop.xlane.xlu0 %1119
        %v1121 = vrcp.pop %v1120
        %v1122 = vmul.f32 %v1117, %v1121
        %v1123 = vpack.c.bf16 %v1122, %v1122
        %v1125 = vsel %vm1111, %v1123, 0
        %1127 = vmatprep.subr.bf16.mxu0 0
        %1128 = vmatpush1.bf16.msra.mxu0 %v1057
        %1129 = vmatprep.subr.bf16.mxu0 0
        %1130 = vmatpush1.bf16.msra.mxu0 0
        %1131 = vmatprep.subr.bf16.mxu0 0
        %1132 = vmatpush1.bf16.msra.mxu0 0
        %1133 = vmatprep.subr.bf16.mxu0 0
        %1134 = vmatpush1.bf16.msra.mxu0 0
        %1135 = vmatprep.subr.bf16.mxu0 0
        %1136 = vmatpush1.bf16.msra.mxu0 0
        %1137 = vmatprep.subr.bf16.mxu0 0
        %1138 = vmatpush1.bf16.msra.mxu0 0
        %1139 = vmatprep.subr.bf16.mxu0 0
        %1140 = vmatpush1.bf16.msra.mxu0 0
        %1141 = vmatprep.subr.bf16.mxu0 0
        %1142 = vmatpush1.bf16.msra.mxu0 0
        %1143 = vmatprep.subr.bf16.mxu0 0
        %1144 = vmatpush1.bf16.msra.mxu0 0
        %1145 = vmatprep.subr.bf16.mxu0 0
        %1146 = vmatpush1.bf16.msra.mxu0 0
        %1147 = vmatprep.subr.bf16.mxu0 0
        %1148 = vmatpush1.bf16.msra.mxu0 0
        %1149 = vmatprep.subr.bf16.mxu0 0
        %1150 = vmatpush1.bf16.msra.mxu0 0
        %1151 = vmatprep.subr.bf16.mxu0 0
        %1152 = vmatpush1.bf16.msra.mxu0 0
        %1153 = vmatprep.subr.bf16.mxu0 0
        %1154 = vmatpush1.bf16.msra.mxu0 0
        %1155 = vmatprep.subr.bf16.mxu0 0
        %1156 = vmatpush1.bf16.msra.mxu0 0
        %1157 = vmatprep.subr.bf16.mxu0 0
        %1158 = vmatpush1.bf16.msra.mxu0 0
        %1159 = vmatprep.mubr.bf16.mxu0 0
        %1160 = vmatmul.mubr.bf16.gmra.mrb[0].mxu0 %v1125
        %v1161 = vpop.f32.mrb[0].mxu0
        %v1162 = vadd.f32 0.0, %v1161
        %v1163 = vpop.f32.mrb[0].mxu0
        %v1164 = vpop.f32.mrb[0].mxu0
        %v1165 = vpop.f32.mrb[0].mxu0
        %1166 = vdwg.mxu0
        %v1167 = vpack.c.bf16 %v1162, %v1162
        %vm1168 = vcmask 60416
        %1169 = vst.msk [vmem:[#allocation4] sm:$0xf] %vm1168, %v1167
        %v1170 = vld [vmem:[#allocation2] sm:$0xff]
        %v1171 = vld [vmem:[#allocation3] sm:$0xff]
        %1173 = vrot.lane.b32.xlu0 %v1053, 120
        %v1174 = vpop.permute.xlu0 %1173
        %1176 = vrot.lane.b32.xlu0 %v1170, 120
        %v1177 = vpop.permute.xlu0 %1176
        %v1179 = vsel %vm1064, %v1174, 0
        %v1182 = vsel %vm1064, %v1177, 0
        %1184 = vmatprep.subr.bf16.mxu0 0
        %1185 = vmatpush1.bf16.xpose.msra.mxu0 %v1182
        %1186 = vmatprep.subr.bf16.mxu0 0
        %1187 = vmatpush1.bf16.xpose.msra.mxu0 0
        %1188 = vmatprep.subr.bf16.mxu0 0
        %1189 = vmatpush1.bf16.xpose.msra.mxu0 0
        %1190 = vmatprep.subr.bf16.mxu0 0
        %1191 = vmatpush1.bf16.xpose.msra.mxu0 0
        %1192 = vmatprep.subr.bf16.mxu0 0
        %1193 = vmatpush1.bf16.xpose.msra.mxu0 0
        %1194 = vmatprep.subr.bf16.mxu0 0
        %1195 = vmatpush1.bf16.xpose.msra.mxu0 0
        %1196 = vmatprep.subr.bf16.mxu0 0
        %1197 = vmatpush1.bf16.xpose.msra.mxu0 0
        %1198 = vmatprep.subr.bf16.mxu0 0
        %1199 = vmatpush1.bf16.xpose.msra.mxu0 0
        %1200 = vmatprep.subr.bf16.mxu0 0
        %1201 = vmatpush1.bf16.xpose.msra.mxu0 0
        %1202 = vmatprep.subr.bf16.mxu0 0
        %1203 = vmatpush1.bf16.xpose.msra.mxu0 0
        %1204 = vmatprep.subr.bf16.mxu0 0
        %1205 = vmatpush1.bf16.xpose.msra.mxu0 0
        %1206 = vmatprep.subr.bf16.mxu0 0
        %1207 = vmatpush1.bf16.xpose.msra.mxu0 0
        %1208 = vmatprep.subr.bf16.mxu0 0
        %1209 = vmatpush1.bf16.xpose.msra.mxu0 0
        %1210 = vmatprep.subr.bf16.mxu0 0
        %1211 = vmatpush1.bf16.xpose.msra.mxu0 0
        %1212 = vmatprep.subr.bf16.mxu0 0
        %1213 = vmatpush1.bf16.xpose.msra.mxu0 0
        %1214 = vmatprep.subr.bf16.mxu0 0
        %1215 = vmatpush1.bf16.xpose.msra.mxu0 0
        %1216 = vmatprep.mubr.bf16.mxu0 0
        %1217 = vmatmul.mubr.bf16.gmra.mrb[0].mxu0 %v1179
        %v1218 = vpop.f32.mrb[0].mxu0
        %v1219 = vadd.f32 %v1062, %v1218
        %v1220 = vpop.f32.mrb[0].mxu0
        %v1221 = vpop.f32.mrb[0].mxu0
        %v1222 = vpop.f32.mrb[0].mxu0
        %1223 = vdwg.mxu0
        %v1224 = vsel %vm1111, %v1219, -inf
        %1225 = vmax.xlane.f32.xlu0 %v1224
        %v1226 = vpop.xlane.xlu0 %1225
        %v1227 = vsub.f32 %v1219, %v1226
        %v1228 = vmul.f32 %v1227, 1.442695
        %v1229 = vpow.pop %v1228
        %v1230 = vsel %vm1111, %v1229, 0.0
        %1231 = vadd.xlane.f32.xlu0 %v1230
        %v1232 = vpop.xlane.xlu0 %1231
        %v1233 = vrcp.pop %v1232
        %v1234 = vmul.f32 %v1229, %v1233
        %v1235 = vpack.c.bf16 %v1234, %v1234
        %1237 = vrot.lane.b32.xlu0 %v1171, 120
        %v1238 = vpop.permute.xlu0 %1237
        %v1241 = vsel %vm1111, %v1235, 0
        %1243 = vmatprep.subr.bf16.mxu0 0
        %1244 = vmatpush1.bf16.msra.mxu0 %v1238
        %1245 = vmatprep.subr.bf16.mxu0 0
        %1246 = vmatpush1.bf16.msra.mxu0 0
        %1247 = vmatprep.subr.bf16.mxu0 0
        %1248 = vmatpush1.bf16.msra.mxu0 0
        %1249 = vmatprep.subr.bf16.mxu0 0
        %1250 = vmatpush1.bf16.msra.mxu0 0
        %1251 = vmatprep.subr.bf16.mxu0 0
        %1252 = vmatpush1.bf16.msra.mxu0 0
        %1253 = vmatprep.subr.bf16.mxu0 0
        %1254 = vmatpush1.bf16.msra.mxu0 0
        %1255 = vmatprep.subr.bf16.mxu0 0
        %1256 = vmatpush1.bf16.msra.mxu0 0
        %1257 = vmatprep.subr.bf16.mxu0 0
        %1258 = vmatpush1.bf16.msra.mxu0 0
        %1259 = vmatprep.subr.bf16.mxu0 0
        %1260 = vmatpush1.bf16.msra.mxu0 0
        %1261 = vmatprep.subr.bf16.mxu0 0
        %1262 = vmatpush1.bf16.msra.mxu0 0
        %1263 = vmatprep.subr.bf16.mxu0 0
        %1264 = vmatpush1.bf16.msra.mxu0 0
        %1265 = vmatprep.subr.bf16.mxu0 0
        %1266 = vmatpush1.bf16.msra.mxu0 0
        %1267 = vmatprep.subr.bf16.mxu0 0
        %1268 = vmatpush1.bf16.msra.mxu0 0
        %1269 = vmatprep.subr.bf16.mxu0 0
        %1270 = vmatpush1.bf16.msra.mxu0 0
        %1271 = vmatprep.subr.bf16.mxu0 0
        %1272 = vmatpush1.bf16.msra.mxu0 0
        %1273 = vmatprep.subr.bf16.mxu0 0
        %1274 = vmatpush1.bf16.msra.mxu0 0
        %1275 = vmatprep.mubr.bf16.mxu0 0
        %1276 = vmatmul.mubr.bf16.gmra.mrb[0].mxu0 %v1241
        %v1277 = vpop.f32.mrb[0].mxu0
        %v1278 = vadd.f32 0.0, %v1277
        %v1279 = vpop.f32.mrb[0].mxu0
        %v1280 = vpop.f32.mrb[0].mxu0
        %v1281 = vpop.f32.mrb[0].mxu0
        %1282 = vdwg.mxu0
        %v1283 = vpack.c.bf16 %v1278, %v1278
        %v1285 = vunpack.c.l.b16 %v1283
        %v1286 = vpack.c.b16 %v1285, %v1285
        %1287 = vrot.lane.b32.xlu0 %v1286, 8
        %v1288 = vpop.permute.xlu0 %1287
        %vm1290 = vcmask 126016
        %1291 = vst.msk [vmem:[#allocation4] sm:$0xf] %vm1290, %v1288
        %v1292 = vld [vmem:[#allocation2] sm:$0xff]
        %v1293 = vld [vmem:[#allocation3] sm:$0xff]
        %1294 = vrot.lane.b32.xlu0 %v1053, 112
        %v1295 = vpop.permute.xlu0 %1294
        %1297 = vrot.lane.b32.xlu0 %v1292, 112
        %v1298 = vpop.permute.xlu0 %1297
        %v1300 = vsel %vm1064, %v1295, 0
        %v1303 = vsel %vm1064, %v1298, 0
        %1305 = vmatprep.subr.bf16.mxu0 0
        %1306 = vmatpush1.bf16.xpose.msra.mxu0 %v1303
        %1307 = vmatprep.subr.bf16.mxu0 0
        %1308 = vmatpush1.bf16.xpose.msra.mxu0 0
        %1309 = vmatprep.subr.bf16.mxu0 0
        %1310 = vmatpush1.bf16.xpose.msra.mxu0 0
        %1311 = vmatprep.subr.bf16.mxu0 0
        %1312 = vmatpush1.bf16.xpose.msra.mxu0 0
        %1313 = vmatprep.subr.bf16.mxu0 0
        %1314 = vmatpush1.bf16.xpose.msra.mxu0 0
        %1315 = vmatprep.subr.bf16.mxu0 0
        %1316 = vmatpush1.bf16.xpose.msra.mxu0 0
        %1317 = vmatprep.subr.bf16.mxu0 0
        %1318 = vmatpush1.bf16.xpose.msra.mxu0 0
        %1319 = vmatprep.subr.bf16.mxu0 0
        %1320 = vmatpush1.bf16.xpose.msra.mxu0 0
        %1321 = vmatprep.subr.bf16.mxu0 0
        %1322 = vmatpush1.bf16.xpose.msra.mxu0 0
        %1323 = vmatprep.subr.bf16.mxu0 0
        %1324 = vmatpush1.bf16.xpose.msra.mxu0 0
        %1325 = vmatprep.subr.bf16.mxu0 0
        %1326 = vmatpush1.bf16.xpose.msra.mxu0 0
        %1327 = vmatprep.subr.bf16.mxu0 0
        %1328 = vmatpush1.bf16.xpose.msra.mxu0 0
        %1329 = vmatprep.subr.bf16.mxu0 0
        %1330 = vmatpush1.bf16.xpose.msra.mxu0 0
        %1331 = vmatprep.subr.bf16.mxu0 0
        %1332 = vmatpush1.bf16.xpose.msra.mxu0 0
        %1333 = vmatprep.subr.bf16.mxu0 0
        %1334 = vmatpush1.bf16.xpose.msra.mxu0 0
        %1335 = vmatprep.subr.bf16.mxu0 0
        %1336 = vmatpush1.bf16.xpose.msra.mxu0 0
        %1337 = vmatprep.mubr.bf16.mxu0 0
        %1338 = vmatmul.mubr.bf16.gmra.mrb[0].mxu0 %v1300
        %v1339 = vpop.f32.mrb[0].mxu0
        %v1340 = vadd.f32 %v1062, %v1339
        %v1341 = vpop.f32.mrb[0].mxu0
        %v1342 = vpop.f32.mrb[0].mxu0
        %v1343 = vpop.f32.mrb[0].mxu0
        %1344 = vdwg.mxu0
        %v1345 = vsel %vm1111, %v1340, -inf
        %1346 = vmax.xlane.f32.xlu0 %v1345
        %v1347 = vpop.xlane.xlu0 %1346
        %v1348 = vsub.f32 %v1340, %v1347
        %v1349 = vmul.f32 %v1348, 1.442695
        %v1350 = vpow.pop %v1349
        %v1351 = vsel %vm1111, %v1350, 0.0
        %1352 = vadd.xlane.f32.xlu0 %v1351
        %v1353 = vpop.xlane.xlu0 %1352
        %v1354 = vrcp.pop %v1353
        %v1355 = vmul.f32 %v1350, %v1354
        %v1356 = vpack.c.bf16 %v1355, %v1355
        %1358 = vrot.lane.b32.xlu0 %v1293, 112
        %v1359 = vpop.permute.xlu0 %1358
        %v1362 = vsel %vm1111, %v1356, 0
        %1364 = vmatprep.subr.bf16.mxu0 0
        %1365 = vmatpush1.bf16.msra.mxu0 %v1359
        %1366 = vmatprep.subr.bf16.mxu0 0
        %1367 = vmatpush1.bf16.msra.mxu0 0
        %1368 = vmatprep.subr.bf16.mxu0 0
        %1369 = vmatpush1.bf16.msra.mxu0 0
        %1370 = vmatprep.subr.bf16.mxu0 0
        %1371 = vmatpush1.bf16.msra.mxu0 0
        %1372 = vmatprep.subr.bf16.mxu0 0
        %1373 = vmatpush1.bf16.msra.mxu0 0
        %1374 = vmatprep.subr.bf16.mxu0 0
        %1375 = vmatpush1.bf16.msra.mxu0 0
        %1376 = vmatprep.subr.bf16.mxu0 0
        %1377 = vmatpush1.bf16.msra.mxu0 0
        %1378 = vmatprep.subr.bf16.mxu0 0
        %1379 = vmatpush1.bf16.msra.mxu0 0
        %1380 = vmatprep.subr.bf16.mxu0 0
        %1381 = vmatpush1.bf16.msra.mxu0 0
        %1382 = vmatprep.subr.bf16.mxu0 0
        %1383 = vmatpush1.bf16.msra.mxu0 0
        %1384 = vmatprep.subr.bf16.mxu0 0
        %1385 = vmatpush1.bf16.msra.mxu0 0
        %1386 = vmatprep.subr.bf16.mxu0 0
        %1387 = vmatpush1.bf16.msra.mxu0 0
        %1388 = vmatprep.subr.bf16.mxu0 0
        %1389 = vmatpush1.bf16.msra.mxu0 0
        %1390 = vmatprep.subr.bf16.mxu0 0
        %1391 = vmatpush1.bf16.msra.mxu0 0
        %1392 = vmatprep.subr.bf16.mxu0 0
        %1393 = vmatpush1.bf16.msra.mxu0 0
        %1394 = vmatprep.subr.bf16.mxu0 0
        %1395 = vmatpush1.bf16.msra.mxu0 0
        %1396 = vmatprep.mubr.bf16.mxu0 0
        %1397 = vmatmul.mubr.bf16.gmra.mrb[0].mxu0 %v1362
        %v1398 = vpop.f32.mrb[0].mxu0
        %v1399 = vadd.f32 0.0, %v1398
        %v1400 = vpop.f32.mrb[0].mxu0
        %v1401 = vpop.f32.mrb[0].mxu0
        %v1402 = vpop.f32.mrb[0].mxu0
        %1403 = vdwg.mxu0
        %v1404 = vpack.c.bf16 %v1399, %v1399
        %v1406 = vunpack.c.l.b16 %v1404
        %v1407 = vpack.c.b16 %v1406, %v1406
        %1408 = vrot.lane.b32.xlu0 %v1407, 16
        %v1409 = vpop.permute.xlu0 %1408
        %vm1411 = vcmask 191616
        %1412 = vst.msk [vmem:[#allocation4] sm:$0xf] %vm1411, %v1409
        %v1413 = vld [vmem:[#allocation2] sm:$0xff]
        %v1414 = vld [vmem:[#allocation3] sm:$0xff]
        %1415 = vrot.lane.b32.xlu0 %v1053, 104
        %v1416 = vpop.permute.xlu0 %1415
        %1418 = vrot.lane.b32.xlu0 %v1413, 104
        %v1419 = vpop.permute.xlu0 %1418
        %v1421 = vsel %vm1064, %v1416, 0
        %v1424 = vsel %vm1064, %v1419, 0
        %1426 = vmatprep.subr.bf16.mxu0 0
        %1427 = vmatpush1.bf16.xpose.msra.mxu0 %v1424
        %1428 = vmatprep.subr.bf16.mxu0 0
        %1429 = vmatpush1.bf16.xpose.msra.mxu0 0
        %1430 = vmatprep.subr.bf16.mxu0 0
        %1431 = vmatpush1.bf16.xpose.msra.mxu0 0
        %1432 = vmatprep.subr.bf16.mxu0 0
        %1433 = vmatpush1.bf16.xpose.msra.mxu0 0
        %1434 = vmatprep.subr.bf16.mxu0 0
        %1435 = vmatpush1.bf16.xpose.msra.mxu0 0
        %1436 = vmatprep.subr.bf16.mxu0 0
        %1437 = vmatpush1.bf16.xpose.msra.mxu0 0
        %1438 = vmatprep.subr.bf16.mxu0 0
        %1439 = vmatpush1.bf16.xpose.msra.mxu0 0
        %1440 = vmatprep.subr.bf16.mxu0 0
        %1441 = vmatpush1.bf16.xpose.msra.mxu0 0
        %1442 = vmatprep.subr.bf16.mxu0 0
        %1443 = vmatpush1.bf16.xpose.msra.mxu0 0
        %1444 = vmatprep.subr.bf16.mxu0 0
        %1445 = vmatpush1.bf16.xpose.msra.mxu0 0
        %1446 = vmatprep.subr.bf16.mxu0 0
        %1447 = vmatpush1.bf16.xpose.msra.mxu0 0
        %1448 = vmatprep.subr.bf16.mxu0 0
        %1449 = vmatpush1.bf16.xpose.msra.mxu0 0
        %1450 = vmatprep.subr.bf16.mxu0 0
        %1451 = vmatpush1.bf16.xpose.msra.mxu0 0
        %1452 = vmatprep.subr.bf16.mxu0 0
        %1453 = vmatpush1.bf16.xpose.msra.mxu0 0
        %1454 = vmatprep.subr.bf16.mxu0 0
        %1455 = vmatpush1.bf16.xpose.msra.mxu0 0
        %1456 = vmatprep.subr.bf16.mxu0 0
        %1457 = vmatpush1.bf16.xpose.msra.mxu0 0
        %1458 = vmatprep.mubr.bf16.mxu0 0
        %1459 = vmatmul.mubr.bf16.gmra.mrb[0].mxu0 %v1421
        %v1460 = vpop.f32.mrb[0].mxu0
        %v1461 = vadd.f32 %v1062, %v1460
        %v1462 = vpop.f32.mrb[0].mxu0
        %v1463 = vpop.f32.mrb[0].mxu0
        %v1464 = vpop.f32.mrb[0].mxu0
        %1465 = vdwg.mxu0
        %v1466 = vsel %vm1111, %v1461, -inf
        %1467 = vmax.xlane.f32.xlu0 %v1466
        %v1468 = vpop.xlane.xlu0 %1467
        %v1469 = vsub.f32 %v1461, %v1468
        %v1470 = vmul.f32 %v1469, 1.442695
        %v1471 = vpow.pop %v1470
        %v1472 = vsel %vm1111, %v1471, 0.0
        %1473 = vadd.xlane.f32.xlu0 %v1472
        %v1474 = vpop.xlane.xlu0 %1473
        %v1475 = vrcp.pop %v1474
        %v1476 = vmul.f32 %v1471, %v1475
        %v1477 = vpack.c.bf16 %v1476, %v1476
        %1479 = vrot.lane.b32.xlu0 %v1414, 104
        %v1480 = vpop.permute.xlu0 %1479
        %v1483 = vsel %vm1111, %v1477, 0
        %1485 = vmatprep.subr.bf16.mxu0 0
        %1486 = vmatpush1.bf16.msra.mxu0 %v1480
        %1487 = vmatprep.subr.bf16.mxu0 0
        %1488 = vmatpush1.bf16.msra.mxu0 0
        %1489 = vmatprep.subr.bf16.mxu0 0
        %1490 = vmatpush1.bf16.msra.mxu0 0
        %1491 = vmatprep.subr.bf16.mxu0 0
        %1492 = vmatpush1.bf16.msra.mxu0 0
        %1493 = vmatprep.subr.bf16.mxu0 0
        %1494 = vmatpush1.bf16.msra.mxu0 0
        %1495 = vmatprep.subr.bf16.mxu0 0
        %1496 = vmatpush1.bf16.msra.mxu0 0
        %1497 = vmatprep.subr.bf16.mxu0 0
        %1498 = vmatpush1.bf16.msra.mxu0 0
        %1499 = vmatprep.subr.bf16.mxu0 0
        %1500 = vmatpush1.bf16.msra.mxu0 0
        %1501 = vmatprep.subr.bf16.mxu0 0
        %1502 = vmatpush1.bf16.msra.mxu0 0
        %1503 = vmatprep.subr.bf16.mxu0 0
        %1504 = vmatpush1.bf16.msra.mxu0 0
        %1505 = vmatprep.subr.bf16.mxu0 0
        %1506 = vmatpush1.bf16.msra.mxu0 0
        %1507 = vmatprep.subr.bf16.mxu0 0
        %1508 = vmatpush1.bf16.msra.mxu0 0
        %1509 = vmatprep.subr.bf16.mxu0 0
        %1510 = vmatpush1.bf16.msra.mxu0 0
        %1511 = vmatprep.subr.bf16.mxu0 0
        %1512 = vmatpush1.bf16.msra.mxu0 0
        %1513 = vmatprep.subr.bf16.mxu0 0
        %1514 = vmatpush1.bf16.msra.mxu0 0
        %1515 = vmatprep.subr.bf16.mxu0 0
        %1516 = vmatpush1.bf16.msra.mxu0 0
        %1517 = vmatprep.mubr.bf16.mxu0 0
        %1518 = vmatmul.mubr.bf16.gmra.mrb[0].mxu0 %v1483
        %v1519 = vpop.f32.mrb[0].mxu0
        %v1520 = vadd.f32 0.0, %v1519
        %v1521 = vpop.f32.mrb[0].mxu0
        %v1522 = vpop.f32.mrb[0].mxu0
        %v1523 = vpop.f32.mrb[0].mxu0
        %1524 = vdwg.mxu0
        %v1525 = vpack.c.bf16 %v1520, %v1520
        %v1527 = vunpack.c.l.b16 %v1525
        %v1528 = vpack.c.b16 %v1527, %v1527
        %1529 = vrot.lane.b32.xlu0 %v1528, 24
        %v1530 = vpop.permute.xlu0 %1529
        %vm1532 = vcmask 257216
        %1533 = vst.msk [vmem:[#allocation4] sm:$0xf] %vm1532, %v1530
        %v1534 = vld [vmem:[#allocation4] sm:$0xf]
        %v1535 = vld [vmem:[%s9] sm:$0xf]
        %v1536 = vld [vmem:[%s9 + $0x4] sm:$0xf]
        %v1537 = vld [vmem:[%s9 + $0x8] sm:$0xf]
        %v1538 = vld [vmem:[%s9 + $0xc] sm:$0xf]
        %v1539 = vld [vmem:[#allocation14] sm:$0x1]
        %v1541 = vlaneseq
        %v1542 = vshrl.u32 %v1541, 7
        %v1543 = vsub.s32 0, %v1542
        %v1544 = vrot.slane %v1539, %v1543
        %v1550 = vunpack.c.l.b16 %v1535
        %v1551 = vunpack.c.l.b16 %v1536
        %v1552 = vunpack.c.l.b16 %v1537
        %v1553 = vunpack.c.l.b16 %v1538
        %v1554 = vpack.c.b16 %v1551, %v1550
        %v1555 = vpack.c.b16 %v1553, %v1552
        %v1559 = vsel %vm1008, %v1534, 0
        %1561 = vmatprep.subr.bf16.mxu0 0
        %1562 = vmatpush1.bf16.msra.mxu0 %v1554
        %1563 = vmatprep.subr.bf16.mxu0 0
        %1564 = vmatpush1.bf16.msra.mxu0 %v1555
        %1565 = vmatprep.subr.bf16.mxu0 0
        %1566 = vmatpush1.bf16.msra.mxu0 0
        %1567 = vmatprep.subr.bf16.mxu0 0
        %1568 = vmatpush1.bf16.msra.mxu0 0
        %1569 = vmatprep.subr.bf16.mxu0 0
        %1570 = vmatpush1.bf16.msra.mxu0 0
        %1571 = vmatprep.subr.bf16.mxu0 0
        %1572 = vmatpush1.bf16.msra.mxu0 0
        %1573 = vmatprep.subr.bf16.mxu0 0
        %1574 = vmatpush1.bf16.msra.mxu0 0
        %1575 = vmatprep.subr.bf16.mxu0 0
        %1576 = vmatpush1.bf16.msra.mxu0 0
        %1577 = vmatprep.subr.bf16.mxu0 0
        %1578 = vmatpush1.bf16.msra.mxu0 0
        %1579 = vmatprep.subr.bf16.mxu0 0
        %1580 = vmatpush1.bf16.msra.mxu0 0
        %1581 = vmatprep.subr.bf16.mxu0 0
        %1582 = vmatpush1.bf16.msra.mxu0 0
        %1583 = vmatprep.subr.bf16.mxu0 0
        %1584 = vmatpush1.bf16.msra.mxu0 0
        %1585 = vmatprep.subr.bf16.mxu0 0
        %1586 = vmatpush1.bf16.msra.mxu0 0
        %1587 = vmatprep.subr.bf16.mxu0 0
        %1588 = vmatpush1.bf16.msra.mxu0 0
        %1589 = vmatprep.subr.bf16.mxu0 0
        %1590 = vmatpush1.bf16.msra.mxu0 0
        %1591 = vmatprep.subr.bf16.mxu0 0
        %1592 = vmatpush1.bf16.msra.mxu0 0
        %1593 = vmatprep.mubr.bf16.mxu0 0
        %1594 = vmatmul.mubr.bf16.gmra.mrb[0].mxu0 %v1559
        %v1595 = vpop.f32.mrb[0].mxu0
        %v1596 = vadd.f32 %v1544, %v1595
        %v1597 = vpop.f32.mrb[0].mxu0
        %v1598 = vpop.f32.mrb[0].mxu0
        %v1599 = vpop.f32.mrb[0].mxu0
        %1600 = vdwg.mxu0
        %v1601 = vunpack.c.l.bf16 %v980
        %v1602 = vadd.f32 %v1601, %v1596
        %v1603 = vld [vmem:[#allocation16] sm:$0x1]
        %v1604 = vld [vmem:[#allocation17] sm:$0x1]
        %v1605 = vsel %vm1008, %v1602, 0.0
        %1606 = vadd.xlane.f32.xlu0 %v1605
        %v1607 = vpop.xlane.xlu0 %1606
        %v1608 = vrcp.pop 32.0
        %v1609 = vmul.f32 %v1607, %v1608
        %v1610 = vsub.f32 %v1602, %v1609
        %v1611 = vmul.f32 %v1610, %v1610
        %v1612 = vsel %vm1008, %v1611, 0.0
        %1613 = vadd.xlane.f32.xlu0 %v1612
        %v1614 = vpop.xlane.xlu0 %1613
        %v1615 = vmul.f32 %v1614, %v1608
        %v1616 = vadd.f32 %v1615, 1e-05
        %v1617 = vrsqrt.pop %v1616
        %v1618 = vmul.f32 %v1610, %v1617
        %v1620 = vlaneseq
        %v1621 = vshrl.u32 %v1620, 7
        %v1622 = vsub.s32 0, %v1621
        %v1623 = vrot.slane %v1603, %v1622
        %v1625 = vmul.f32 %v1618, %v1623
        %v1627 = vlaneseq
        %v1628 = vshrl.u32 %v1627, 7
        %v1629 = vsub.s32 0, %v1628
        %v1630 = vrot.slane %v1604, %v1629
        %v1632 = vadd.f32 %v1625, %v1630
        %v1633 = vpack.c.bf16 %v1632, %v1632
        %v1634 = vld [vmem:[%s13] sm:$0xf]
        %v1635 = vld [vmem:[%s13 + $0x4] sm:$0xf]
        %v1636 = vld [vmem:[%s13 + $0x8] sm:$0xf]
        %v1637 = vld [vmem:[%s13 + $0xc] sm:$0xf]
        %v1638 = vld [vmem:[%s14] sm:$0x1]
        %v1640 = vlaneseq
        %v1641 = vshrl.u32 %v1640, 7
        %v1642 = vsub.s32 0, %v1641
        %v1643 = vrot.slane %v1638, %v1642
        %v1649 = vunpack.c.l.b16 %v1634
        %v1650 = vunpack.c.l.b16 %v1635
        %v1651 = vunpack.c.l.b16 %v1636
        %v1652 = vunpack.c.l.b16 %v1637
        %v1653 = vpack.c.b16 %v1650, %v1649
        %v1654 = vpack.c.b16 %v1652, %v1651
        %v1658 = vsel %vm1008, %v1633, 0
        %1660 = vmatprep.subr.bf16.mxu0 0
        %1661 = vmatpush1.bf16.msra.mxu0 %v1653
        %1662 = vmatprep.subr.bf16.mxu0 0
        %1663 = vmatpush1.bf16.msra.mxu0 %v1654
        %1664 = vmatprep.subr.bf16.mxu0 0
        %1665 = vmatpush1.bf16.msra.mxu0 0
        %1666 = vmatprep.subr.bf16.mxu0 0
        %1667 = vmatpush1.bf16.msra.mxu0 0
        %1668 = vmatprep.subr.bf16.mxu0 0
        %1669 = vmatpush1.bf16.msra.mxu0 0
        %1670 = vmatprep.subr.bf16.mxu0 0
        %1671 = vmatpush1.bf16.msra.mxu0 0
        %1672 = vmatprep.subr.bf16.mxu0 0
        %1673 = vmatpush1.bf16.msra.mxu0 0
        %1674 = vmatprep.subr.bf16.mxu0 0
        %1675 = vmatpush1.bf16.msra.mxu0 0
        %1676 = vmatprep.subr.bf16.mxu0 0
        %1677 = vmatpush1.bf16.msra.mxu0 0
        %1678 = vmatprep.subr.bf16.mxu0 0
        %1679 = vmatpush1.bf16.msra.mxu0 0
        %1680 = vmatprep.subr.bf16.mxu0 0
        %1681 = vmatpush1.bf16.msra.mxu0 0
        %1682 = vmatprep.subr.bf16.mxu0 0
        %1683 = vmatpush1.bf16.msra.mxu0 0
        %1684 = vmatprep.subr.bf16.mxu0 0
        %1685 = vmatpush1.bf16.msra.mxu0 0
        %1686 = vmatprep.subr.bf16.mxu0 0
        %1687 = vmatpush1.bf16.msra.mxu0 0
        %1688 = vmatprep.subr.bf16.mxu0 0
        %1689 = vmatpush1.bf16.msra.mxu0 0
        %1690 = vmatprep.subr.bf16.mxu0 0
        %1691 = vmatpush1.bf16.msra.mxu0 0
        %1692 = vmatprep.mubr.bf16.mxu0 0
        %1693 = vmatmul.mubr.bf16.gmra.mrb[0].mxu0 %v1658
        %v1694 = vpop.f32.mrb[0].mxu0
        %v1695 = vadd.f32 %v1643, %v1694
        %v1696 = vpop.f32.mrb[0].mxu0
        %v1697 = vpop.f32.mrb[0].mxu0
        %v1698 = vpop.f32.mrb[0].mxu0
        %1699 = vdwg.mxu0
        %v1700 = vmax.f32 %v1695, 0.0
        %v1701 = vpack.c.bf16 %v1700, %v1700
        %v1702 = vld [vmem:[%s15] sm:$0xf]
        %v1703 = vld [vmem:[%s15 + $0x4] sm:$0xf]
        %v1704 = vld [vmem:[%s15 + $0x8] sm:$0xf]
        %v1705 = vld [vmem:[%s15 + $0xc] sm:$0xf]
        %v1706 = vld [vmem:[%s15 + $0x10] sm:$0xf]
        %v1707 = vld [vmem:[%s15 + $0x14] sm:$0xf]
        %v1708 = vld [vmem:[%s15 + $0x18] sm:$0xf]
        %v1709 = vld [vmem:[%s15 + $0x1c] sm:$0xf]
        %v1710 = vld [vmem:[%s16] sm:$0x1]
        %v1712 = vlaneseq
        %v1713 = vshrl.u32 %v1712, 7
        %v1714 = vsub.s32 0, %v1713
        %v1715 = vrot.slane %v1710, %v1714
        %v1725 = vunpack.c.l.b16 %v1702
        %v1726 = vunpack.c.l.b16 %v1703
        %v1727 = vunpack.c.l.b16 %v1704
        %v1728 = vunpack.c.l.b16 %v1705
        %v1729 = vunpack.c.l.b16 %v1706
        %v1730 = vunpack.c.l.b16 %v1707
        %v1731 = vunpack.c.l.b16 %v1708
        %v1732 = vunpack.c.l.b16 %v1709
        %v1733 = vpack.c.b16 %v1726, %v1725
        %v1734 = vpack.c.b16 %v1728, %v1727
        %v1735 = vpack.c.b16 %v1730, %v1729
        %v1736 = vpack.c.b16 %v1732, %v1731
        %vm1741 = vcmask 523264
        %v1743 = vsel %vm1741, %v1701, 0
        %1745 = vmatprep.subr.bf16.mxu0 0
        %1746 = vmatpush1.bf16.msra.mxu0 %v1733
        %1747 = vmatprep.subr.bf16.mxu0 0
        %1748 = vmatpush1.bf16.msra.mxu0 %v1734
        %1749 = vmatprep.subr.bf16.mxu0 0
        %1750 = vmatpush1.bf16.msra.mxu0 %v1735
        %1751 = vmatprep.subr.bf16.mxu0 0
        %1752 = vmatpush1.bf16.msra.mxu0 %v1736
        %1753 = vmatprep.subr.bf16.mxu0 0
        %1754 = vmatpush1.bf16.msra.mxu0 0
        %1755 = vmatprep.subr.bf16.mxu0 0
        %1756 = vmatpush1.bf16.msra.mxu0 0
        %1757 = vmatprep.subr.bf16.mxu0 0
        %1758 = vmatpush1.bf16.msra.mxu0 0
        %1759 = vmatprep.subr.bf16.mxu0 0
        %1760 = vmatpush1.bf16.msra.mxu0 0
        %1761 = vmatprep.subr.bf16.mxu0 0
        %1762 = vmatpush1.bf16.msra.mxu0 0
        %1763 = vmatprep.subr.bf16.mxu0 0
        %1764 = vmatpush1.bf16.msra.mxu0 0
        %1765 = vmatprep.subr.bf16.mxu0 0
        %1766 = vmatpush1.bf16.msra.mxu0 0
        %1767 = vmatprep.subr.bf16.mxu0 0
        %1768 = vmatpush1.bf16.msra.mxu0 0
        %1769 = vmatprep.subr.bf16.mxu0 0
        %1770 = vmatpush1.bf16.msra.mxu0 0
        %1771 = vmatprep.subr.bf16.mxu0 0
        %1772 = vmatpush1.bf16.msra.mxu0 0
        %1773 = vmatprep.subr.bf16.mxu0 0
        %1774 = vmatpush1.bf16.msra.mxu0 0
        %1775 = vmatprep.subr.bf16.mxu0 0
        %1776 = vmatpush1.bf16.msra.mxu0 0
        %1777 = vmatprep.mubr.bf16.mxu0 0
        %1778 = vmatmul.mubr.bf16.gmra.mrb[0].mxu0 %v1743
        %v1779 = vpop.f32.mrb[0].mxu0
        %v1780 = vadd.f32 %v1715, %v1779
        %v1781 = vpop.f32.mrb[0].mxu0
        %v1782 = vpop.f32.mrb[0].mxu0
        %v1783 = vpop.f32.mrb[0].mxu0
        %1784 = vdwg.mxu0
        %v1785 = vadd.f32 %v1632, %v1780
        %v1786 = vld [vmem:[%s17] sm:$0x1]
        %v1787 = vld [vmem:[%s18] sm:$0x1]
        %v1788 = vsel %vm1008, %v1785, 0.0
        %1789 = vadd.xlane.f32.xlu0 %v1788
        %v1790 = vpop.xlane.xlu0 %1789
        %v1791 = vmul.f32 %v1790, %v1608
        %v1792 = vsub.f32 %v1785, %v1791
        %v1793 = vmul.f32 %v1792, %v1792
        %v1794 = vsel %vm1008, %v1793, 0.0
        %1795 = vadd.xlane.f32.xlu0 %v1794
        %v1796 = vpop.xlane.xlu0 %1795
        %v1797 = vmul.f32 %v1796, %v1608
        %v1798 = vadd.f32 %v1797, 1e-05
        %v1799 = vrsqrt.pop %v1798
        %v1800 = vmul.f32 %v1792, %v1799
        %v1802 = vlaneseq
        %v1803 = vshrl.u32 %v1802, 7
        %v1804 = vsub.s32 0, %v1803
        %v1805 = vrot.slane %v1786, %v1804
        %v1807 = vmul.f32 %v1800, %v1805
        %v1809 = vlaneseq
        %v1810 = vshrl.u32 %v1809, 7
        %v1811 = vsub.s32 0, %v1810
        %v1812 = vrot.slane %v1787, %v1811
        %v1814 = vadd.f32 %v1807, %v1812
        %v1815 = vpack.c.bf16 %v1814, %v1814
        %vm1816 = vcmask 257024
        %1817 = vst.msk [vmem:[%s804] sm:$0xf] %vm1816, %v1815
        %s1818 = sand.u32 %s520, 1
        %s1819 = scalar_lea.sflag [#allocation7], %s1818
        %s1820 = sand.u32 %s520, 1
        %s1821 = smul.addr %s1820, 4
        %s1822 = scalar_lea.vmem [#allocation19], %s1821
        // Predicated region
        $region141: #{tpu_custom_call.1} parent=103 // pred_check
          %p1823 = pneg %p530
        $region142: #{tpu_custom_call.1} parent=103 // pred_check_branch
          %1825 = sbr.rel (%p1823) target = $region144
        $region143: #{tpu_custom_call.1} parent=103 // pred_region
          %s1827 = ssub.s32 64, 64
          %1828 = vsyncadd %s1819, %s1827
          %s1829 = smul.addr %s46, 2
          %s1830 = sadd.s32 %s47, %s1829
          %s1831 = smul.addr %s1830, 64
          %s1832 = scalar_lea.hbm %s21, %s1831
          %s1834 = sshll.u32 %s1822, 4
          %s1835 = int_to_ptr.vmem [resolvable:$true] %s1834
          %1837 = dma.vmem_to_hbm [thread:$0]  %s1835, 64, %s1832, %s1819
        $region144: #{tpu_custom_call.1} parent=103 // pred_fallthru
          _
      $region104: #{tpu_custom_call.1} parent=5 // pred_fallthru
        _
      %p1838 = scmp.le.s32.totalorder 2, %s37
      // Predicated region
      $region145: #{tpu_custom_call.1} parent=5 // pred_check
        %p1839 = pneg %p1838
      $region146: #{tpu_custom_call.1} parent=5 // pred_check_branch
        %1841 = sbr.rel (%p1839) target = $region148
      $region147: #{tpu_custom_call.1} parent=5 // pred_region
        %s1842 = ssub.s32 %s37, 2
        // Predicated region
        $region149: #{tpu_custom_call.1} parent=147 // pred_check
          %p1843 = pneg %p536
        $region150: #{tpu_custom_call.1} parent=147 // pred_check_branch
          %1845 = sbr.rel (%p1843) target = $region152
        $region151: #{tpu_custom_call.1} parent=147 // pred_region
          %s1846 = sand.u32 %s521, 1
          %s1847 = scalar_lea.sflag [#allocation7], %s1846
          %s1848 = sand.u32 %s521, 1
          %s1849 = smul.addr %s1848, 4
          %s1850 = scalar_lea.vmem [#allocation19], %s1849
          %1851 = dma.done %s1847, 64
        $region152: #{tpu_custom_call.1} parent=147 // pred_fallthru
          _
      $region148: #{tpu_custom_call.1} parent=5 // pred_fallthru
        _
    $region6: #{tpu_custom_call.1} parent=1 // loop_footer
      %s41 = sadd.s32 1, %s37
    $region7: #{tpu_custom_call.1} parent=1 // loop_footer_branch
      %36 = sbr.rel target = $region3
    $region8: #{tpu_custom_call.1} parent=1 // loop_exit
      _
    %1852 = vsyncpa [#allocation6], 1
    %s1853 = scalar_lea.sflag [#allocation6], 1
    %1854 = vsyncpa %s1853, 1
    %1855 = vsyncpa [#allocation9], 1
    %1856 = vsyncpa [#allocation12], 1
    %1857 = vsyncpa [#allocation15], 1
    %1858 = vsyncpa [#allocation18], 1
    %1859 = vsyncpa [#allocation7], 1
    %s1860 = scalar_lea.sflag [#allocation7], 1
    %1861 = vsyncpa %s1860, 1

</llo_original>
